<compile_context>
chip_gen: v7x
topology: tpu7x:2x2x1
jax: 0.10.0
libtpu: 0.0.40
codegen_flags: <defaults>
</compile_context>

<pallas_src>
import jax
import jax.numpy as jnp
from jax.experimental import pallas as pl
from jax.experimental.pallas import tpu as pltpu


def _attnpool_kernel(x_ref, wq_ref, bq_ref, wkv_ref, bkvsp_ref, bkvm_ref,
                     wc_ref, bc_ref, sel_ref, selt_ref, o_ref):
    # x_ref:  (1, NB, C, HW) bf16   batch-block of the feature map, native NCHW layout
    # wq:     (C, C)   bf16         Wq^T with 1/sqrt(head_dim) folded in
    # bq:     (1, C)   f32          (pos[0] @ Wq^T + bq) * scale
    # wkv:    (C, 2C)  bf16         fused [Wk^T | Wv^T]
    # bkvsp:  (HW, 2C) f32          pos[1:] @ Wkv^T + bkv   (per-spatial-token K/V bias)
    # bkvm:   (1, 2C)  f32          pos[0]  @ Wkv^T + bkv   (mean-token K/V bias)
    # wc:     (C, OP)  bf16         Wc^T zero-padded to OP = round_up(out_dim, 128)
    # bc:     (1, OP)  f32
    # sel:    (C, H)   f32  / selt: (H, C) f32   0/1 head-selector matrices
    x = x_ref[0]                                             # (NB, C, HW)
    NB, C, HW = x.shape
    sel = sel_ref[...]
    selt = selt_ref[...]
    num_heads = sel.shape[-1]

    # mean over spatial positions (lane reduction) in f32, then cast for the MXU.
    mean_f32 = jnp.mean(x.astype(jnp.float32), axis=2)       # (NB, C)
    mean_lo = mean_f32.astype(x.dtype)

    # Q: only the mean-token row is needed (module returns x[0]); pos & scale folded.
    q = (jnp.dot(mean_lo, wq_ref[...], preferred_element_type=jnp.float32)
         + bq_ref[...])                                       # (NB, C) f32

    # Fused K/V projection of all spatial tokens: on-chip minor-dim swap (no HBM
    # transpose round trip), then one (NB*HW, C) x (C, 2C) MXU pass; the positional
    # contribution arrives as the precomputed additive bias.
    toks = jnp.swapaxes(x, 1, 2).reshape(NB * HW, C)          # (NB*HW, C) bf16
    kv = jnp.dot(toks, wkv_ref[...],
                 preferred_element_type=jnp.float32).reshape(NB, HW, 2 * C)
    kv = kv + bkvsp_ref[...]                                  # (NB, HW, 2C) f32
    k = kv[:, :, :C]
    v = kv[:, :, C:]
    kv_m = (jnp.dot(mean_lo, wkv_ref[...], preferred_element_type=jnp.float32)
            + bkvm_ref[...])                                  # (NB, 2C) f32
    k_m = kv_m[:, :C]
    v_m = kv_m[:, C:]

    # Per-head scores via the head-selector matmul (no head loop / lane slicing):
    #   s[n, j, h] = sum_{c in head h} q[n, c] * k[n, j, c]
    qk = q[:, None, :] * k                                    # (NB, HW, C) f32
    s = jnp.dot(qk.reshape(NB * HW, C), sel,
                preferred_element_type=jnp.float32).reshape(NB, HW, num_heads)
    s_m = jnp.dot(q * k_m, sel, preferred_element_type=jnp.float32)   # (NB, H)

    # Softmax over {mean token, HW spatial tokens} per (batch, head) — all f32.
    m = jnp.maximum(jnp.max(s, axis=1), s_m)                  # (NB, H)
    p = jnp.exp(s - m[:, None, :])                            # (NB, HW, H)
    p_m = jnp.exp(s_m - m)                                    # (NB, H)
    inv = pl.reciprocal(jnp.sum(p, axis=1) + p_m, approx=True)  # (NB, H)

    # Normalise in head space, then expand probabilities back to channel lanes.
    p = p * inv[:, None, :]
    p_m = p_m * inv
    p_full = jnp.dot(p.reshape(NB * HW, num_heads), selt,
                     preferred_element_type=jnp.float32).reshape(NB, HW, C)
    ctx = jnp.sum(p_full * v, axis=1)                          # (NB, C)
    ctx = ctx + jnp.dot(p_m, selt, preferred_element_type=jnp.float32) * v_m

    # Output projection — lane-dense (padded) store.
    o_ref[0] = (jnp.dot(ctx.astype(wc_ref.dtype), wc_ref[...],
                        preferred_element_type=jnp.float32) + bc_ref[...])


def attention_pool_2d(x_nchw, params, num_heads, *, num_batch_blocks=1,
                      compute_dtype=jnp.bfloat16):
    """AttentionPool2d forward. Returns (N, output_dim), matching x[0] of the module.

    num_batch_blocks: 1 on v5e/v6e (single TensorCore); 2 (or a multiple of 2) on v7x
    so the "parallel" batch axis uses both TensorCores. Also size NB = N /
    num_batch_blocks so the per-step block fits scoped VMEM at production sizes.
    compute_dtype: dtype of the MXU operands (feature map / Wq / Wkv / Wc);
    accumulation and the softmax stay float32 inside the kernel.
    """
    N, C, H, W = x_nchw.shape
    HW = H * W
    out_dim = params["wc"].shape[0]
    assert N % num_batch_blocks == 0
    NB = N // num_batch_blocks
    out_pad = ((out_dim + 127) // 128) * 128
    head_dim = C // num_heads
    scale = 1.0 / head_dim ** 0.5
    f32 = jnp.float32

    pos = params["pos"].astype(f32)                   # (HW+1, C)
    pos0, pos_sp = pos[:1], pos[1:]

    # Pre-transpose / fuse linear weights (PyTorch Linear: y = x @ W.T + b); fold the
    # positional embedding and the 1/sqrt(head_dim) scale into weights/biases.
    wq_t = params["wq"].T.astype(f32)                                         # (C, C)
    wkv_t = jnp.concatenate([params["wk"].T, params["wv"].T], 1).astype(f32)  # (C, 2C)
    bkv = jnp.concatenate([params["bk"], params["bv"]]).astype(f32)[None]     # (1, 2C)
    bq_eff = (pos0 @ wq_t + params["bq"].astype(f32)[None]) * scale           # (1, C)
    bkv_sp = pos_sp @ wkv_t + bkv                                             # (HW, 2C)
    bkv_m = pos0 @ wkv_t + bkv                                                # (1, 2C)
    wq_t = wq_t * scale
    wc_t = jnp.pad(params["wc"].T.astype(f32),
                   ((0, 0), (0, out_pad - out_dim)))                          # (C, OP)
    bc = jnp.pad(params["bc"].astype(f32), (0, out_pad - out_dim))[None]      # (1, OP)

    # 0/1 head-selector matrices (channel c belongs to head c // head_dim).
    sel = (jnp.arange(C)[:, None] // head_dim ==
           jnp.arange(num_heads)[None, :]).astype(f32)                        # (C, H)
    sel_t = sel.T

    # bf16 MXU operands; feature map stays in its native (N, C, HW) layout.
    x_in = x_nchw.reshape(num_batch_blocks, NB, C, HW).astype(compute_dtype)
    wq_in = wq_t.astype(compute_dtype)
    wkv_in = wkv_t.astype(compute_dtype)
    wc_in = wc_t.astype(compute_dtype)

    # Explicit scoped-VMEM budget from the actual block sizes (+50% headroom).
    # TODO(synk): cap at ~56 MiB when targeting v7x (64 MiB per-TC VMEM).
    wsz = jnp.dtype(compute_dtype).itemsize
    const_bytes = ((wq_in.size + wkv_in.size + wc_in.size) * wsz          # Buffered(1)
                   + (bq_eff.size + bkv_sp.size + bkv_m.size + bc.size
                      + sel.size + sel_t.size) * 4)
    x_block_bytes = 2 * NB * C * HW * wsz                                 # double-buffered
    o_block_bytes = 2 * NB * out_pad * 4
    interm_bytes = NB * HW * (2 * C + 2 * C + C + 2 * num_heads) * 4      # kv/p_full/qk/p
    vmem_limit = int(1.5 * (const_bytes + x_block_bytes + o_block_bytes + interm_bytes))
    vmem_limit = min(max(vmem_limit, 16 << 20), 96 << 20)

    def _const(shape):
        nd = len(shape)
        return pl.BlockSpec(shape, lambda *_: (0,) * nd, pipeline_mode=pl.Buffered(1))

    out = pl.pallas_call(
        _attnpool_kernel,
        out_shape=jax.ShapeDtypeStruct((num_batch_blocks, NB, out_pad), jnp.float32),
        grid=(num_batch_blocks,),
        in_specs=[
            pl.BlockSpec((1, NB, C, HW), lambda b: (b, 0, 0, 0)),  # feature-map block
            _const((C, C)),            # Wq^T * scale
            _const((1, C)),            # folded q bias
            _const((C, 2 * C)),        # fused Wkv^T
            _const((HW, 2 * C)),       # per-token K/V bias (pos folded)
            _const((1, 2 * C)),        # mean-token K/V bias (pos folded)
            _const((C, out_pad)),      # Wc^T (lane-padded)
            _const((1, out_pad)),      # bc (lane-padded)
            _const((C, num_heads)),    # head selector
            _const((num_heads, C)),    # head selector^T
        ],
        out_specs=pl.BlockSpec((1, NB, out_pad), lambda b: (b, 0, 0)),
        compiler_params=pltpu.CompilerParams(
            dimension_semantics=("parallel",),
            vmem_limit_bytes=vmem_limit),
    )(x_in, wq_in, bq_eff, wkv_in, bkv_sp, bkv_m, wc_in, bc, sel, sel_t)
    return out.reshape(N, out_pad)[:, :out_dim]


def attention_pool_2d_ref(x_nchw, params, num_heads):
    """Pure-JAX f32 reference mirroring F.multi_head_attention_forward semantics."""
    N, C, H, W = x_nchw.shape
    HW = H * W
    L = HW + 1
    hd = C // num_heads
    toks = x_nchw.reshape(N, C, HW).transpose(0, 2, 1)
    toks = jnp.concatenate([toks.mean(axis=1, keepdims=True), toks], axis=1)
    toks = toks + params["pos"][None]
    q = toks @ params["wq"].T + params["bq"]
    k = toks @ params["wk"].T + params["bk"]
    v = toks @ params["wv"].T + params["bv"]
    q = q.reshape(N, L, num_heads, hd).transpose(0, 2, 1, 3) * hd ** -0.5
    k = k.reshape(N, L, num_heads, hd).transpose(0, 2, 1, 3)
    v = v.reshape(N, L, num_heads, hd).transpose(0, 2, 1, 3)
    s = jnp.einsum("nhqd,nhkd->nhqk", q, k)
    p = jax.nn.softmax(s, axis=-1)
    o = jnp.einsum("nhqk,nhkd->nhqd", p, v)
    o = o.transpose(0, 2, 1, 3).reshape(N, L, C)
    out = o @ params["wc"].T + params["bc"]
    return out[:, 0, :]


if __name__ == "__main__":
    # module config: AttentionPool2d(spacial_dim=8, embed_dim=32, num_heads=4, output_dim=32)
    spacial_dim, embed_dim, num_heads, output_dim = 8, 32, 4, 32
    batch = 2
    L = spacial_dim ** 2 + 1

    key = jax.random.PRNGKey(0)
    keys = jax.random.split(key, 11)
    params = {
        "pos": jax.random.normal(keys[0], (L, embed_dim), jnp.float32) / embed_dim ** 0.5,
        "wq": jax.random.normal(keys[1], (embed_dim, embed_dim), jnp.float32) * 0.05,
        "bq": jax.random.normal(keys[2], (embed_dim,), jnp.float32) * 0.05,
        "wk": jax.random.normal(keys[3], (embed_dim, embed_dim), jnp.float32) * 0.05,
        "bk": jax.random.normal(keys[4], (embed_dim,), jnp.float32) * 0.05,
        "wv": jax.random.normal(keys[5], (embed_dim, embed_dim), jnp.float32) * 0.05,
        "bv": jax.random.normal(keys[6], (embed_dim,), jnp.float32) * 0.05,
        "wc": jax.random.normal(keys[7], (output_dim, embed_dim), jnp.float32) * 0.05,
        "bc": jax.random.normal(keys[8], (output_dim,), jnp.float32) * 0.05,
    }
    x = jax.random.normal(keys[9], (batch, embed_dim, spacial_dim, spacial_dim), jnp.float32)

    ref = attention_pool_2d_ref(x, params, num_heads)

    # default production path: bf16 MXU operands, f32 accumulation / softmax
    out_bf16 = jax.block_until_ready(attention_pool_2d(x, params, num_heads))
    assert out_bf16.shape == (batch, output_dim), out_bf16.shape
    err_bf16 = float(jnp.max(jnp.abs(out_bf16 - ref)))
    assert err_bf16 < 3e-2, f"bf16 path mismatch vs reference: {err_bf16}"

    # f32-operand run for a tight numerical check of the kernel structure
    out_f32 = jax.block_until_ready(
        attention_pool_2d(x, params, num_heads, compute_dtype=jnp.float32))
    err_f32 = float(jnp.max(jnp.abs(out_f32 - ref)))
    # tolerance allows for the EUP approximate reciprocal in the softmax denominator
    assert err_f32 < 5e-4, f"f32 path mismatch vs reference: {err_f32}"

    print("KERNEL_OK")
</pallas_src>

<mosaic_0001>
module attributes {stable_mosaic.version = 11 : i64} {
  func.func @_attnpool_kernel(%arg0: i32, %arg1: memref<1x2x32x64xbf16, #tpu.memory_space<vmem>>, %arg2: memref<32x32xbf16, #tpu.memory_space<vmem>>, %arg3: memref<1x32xf32, #tpu.memory_space<vmem>>, %arg4: memref<32x64xbf16, #tpu.memory_space<vmem>>, %arg5: memref<64x64xf32, #tpu.memory_space<vmem>>, %arg6: memref<1x64xf32, #tpu.memory_space<vmem>>, %arg7: memref<32x128xbf16, #tpu.memory_space<vmem>>, %arg8: memref<1x128xf32, #tpu.memory_space<vmem>>, %arg9: memref<32x4xf32, #tpu.memory_space<vmem>>, %arg10: memref<4x32xf32, #tpu.memory_space<vmem>>, %arg11: memref<1x2x128xf32, #tpu.memory_space<vmem>>) attributes {dimension_semantics = [#tpu.dimension_semantics<parallel>], iteration_bounds = array<i64: 1>, scalar_prefetch = 0 : i64, scratch_operands = 0 : i64, tpu.core_type = #tpu.core_type<tc>, window_params = [{transform_indices = @transform_0, window_bounds = array<i64: 1, 2, 32, 64>}, {pipeline_mode = #tpu.pipeline_mode<synchronous>, transform_indices = @transform_1, window_bounds = array<i64: 32, 32>}, {pipeline_mode = #tpu.pipeline_mode<synchronous>, transform_indices = @transform_2, window_bounds = array<i64: 1, 32>}, {pipeline_mode = #tpu.pipeline_mode<synchronous>, transform_indices = @transform_3, window_bounds = array<i64: 32, 64>}, {pipeline_mode = #tpu.pipeline_mode<synchronous>, transform_indices = @transform_4, window_bounds = array<i64: 64, 64>}, {pipeline_mode = #tpu.pipeline_mode<synchronous>, transform_indices = @transform_5, window_bounds = array<i64: 1, 64>}, {pipeline_mode = #tpu.pipeline_mode<synchronous>, transform_indices = @transform_6, window_bounds = array<i64: 32, 128>}, {pipeline_mode = #tpu.pipeline_mode<synchronous>, transform_indices = @transform_7, window_bounds = array<i64: 1, 128>}, {pipeline_mode = #tpu.pipeline_mode<synchronous>, transform_indices = @transform_8, window_bounds = array<i64: 32, 4>}, {pipeline_mode = #tpu.pipeline_mode<synchronous>, transform_indices = @transform_9, window_bounds = array<i64: 4, 32>}, {transform_indices = @transform_10, window_bounds = array<i64: 1, 2, 128>}]} {
    %c0 = arith.constant 0 : index
    %c0_0 = arith.constant 0 : index
    %c0_1 = arith.constant 0 : index
    %c0_2 = arith.constant 0 : index
    %0 = vector.load %arg1[%c0, %c0_0, %c0_1, %c0_2] : memref<1x2x32x64xbf16, #tpu.memory_space<vmem>>, vector<1x2x32x64xbf16>
    %1 = vector.shape_cast %0 : vector<1x2x32x64xbf16> to vector<2x32x64xbf16>
    %c0_3 = arith.constant 0 : index
    %c0_4 = arith.constant 0 : index
    %2 = vector.load %arg9[%c0_3, %c0_4] : memref<32x4xf32, #tpu.memory_space<vmem>>, vector<32x4xf32>
    %c0_5 = arith.constant 0 : index
    %c0_6 = arith.constant 0 : index
    %3 = vector.load %arg10[%c0_5, %c0_6] : memref<4x32xf32, #tpu.memory_space<vmem>>, vector<4x32xf32>
    %4 = arith.extf %1 : vector<2x32x64xbf16> to vector<2x32x64xf32>
    %cst = arith.constant dense<0.000000e+00> : vector<2x32xf32>
    %5 = vector.multi_reduction <add>, %4, %cst [2] : vector<2x32x64xf32> to vector<2x32xf32>
    %cst_7 = arith.constant 6.400000e+01 : f32
    %6 = vector.broadcast %cst_7 : f32 to vector<2x32xf32>
    %7 = arith.divf %5, %6 : vector<2x32xf32>
    %8 = arith.truncf %7 : vector<2x32xf32> to vector<2x32xbf16>
    %c0_8 = arith.constant 0 : index
    %c0_9 = arith.constant 0 : index
    %9 = vector.load %arg2[%c0_8, %c0_9] : memref<32x32xbf16, #tpu.memory_space<vmem>>, vector<32x32xbf16>
    %cst_10 = arith.constant dense<0.000000e+00> : vector<2x32xf32>
    %10 = tpu.matmul %8, %9, %cst_10 {dimension_numbers = #tpu.dot_dimension_numbers<[1], [0], [0], [1], [0, 0, 1, 1], [], []>} : vector<2x32xbf16>, vector<32x32xbf16>, vector<2x32xf32> -> vector<2x32xf32>
    %c0_11 = arith.constant 0 : index
    %c0_12 = arith.constant 0 : index
    %11 = vector.load %arg3[%c0_11, %c0_12] : memref<1x32xf32, #tpu.memory_space<vmem>>, vector<1x32xf32>
    %12 = vector.broadcast %11 : vector<1x32xf32> to vector<2x32xf32>
    %13 = arith.addf %10, %12 : vector<2x32xf32>
    %14 = tpu.transpose %1, [0, 2, 1] : vector<2x32x64xbf16> -> vector<2x64x32xbf16>
    %15 = vector.shape_cast %14 : vector<2x64x32xbf16> to vector<128x32xbf16>
    %c0_13 = arith.constant 0 : index
    %c0_14 = arith.constant 0 : index
    %16 = vector.load %arg4[%c0_13, %c0_14] : memref<32x64xbf16, #tpu.memory_space<vmem>>, vector<32x64xbf16>
    %cst_15 = arith.constant dense<0.000000e+00> : vector<128x64xf32>
    %17 = tpu.matmul %15, %16, %cst_15 {dimension_numbers = #tpu.dot_dimension_numbers<[1], [0], [0], [1], [0, 0, 1, 1], [], []>} : vector<128x32xbf16>, vector<32x64xbf16>, vector<128x64xf32> -> vector<128x64xf32>
    %18 = vector.shape_cast %17 : vector<128x64xf32> to vector<2x64x64xf32>
    %c0_16 = arith.constant 0 : index
    %c0_17 = arith.constant 0 : index
    %19 = vector.load %arg5[%c0_16, %c0_17] : memref<64x64xf32, #tpu.memory_space<vmem>>, vector<64x64xf32>
    %20 = vector.shape_cast %19 : vector<64x64xf32> to vector<1x64x64xf32>
    %21 = vector.broadcast %20 : vector<1x64x64xf32> to vector<2x64x64xf32>
    %22 = arith.addf %18, %21 : vector<2x64x64xf32>
    %23 = vector.extract_strided_slice %22 {offsets = [0, 0, 0], sizes = [2, 64, 32], strides = [1, 1, 1]} : vector<2x64x64xf32> to vector<2x64x32xf32>
    %24 = vector.extract_strided_slice %22 {offsets = [0, 0, 32], sizes = [2, 64, 32], strides = [1, 1, 1]} : vector<2x64x64xf32> to vector<2x64x32xf32>
    %c0_18 = arith.constant 0 : index
    %c0_19 = arith.constant 0 : index
    %25 = vector.load %arg4[%c0_18, %c0_19] : memref<32x64xbf16, #tpu.memory_space<vmem>>, vector<32x64xbf16>
    %cst_20 = arith.constant dense<0.000000e+00> : vector<2x64xf32>
    %26 = tpu.matmul %8, %25, %cst_20 {dimension_numbers = #tpu.dot_dimension_numbers<[1], [0], [0], [1], [0, 0, 1, 1], [], []>} : vector<2x32xbf16>, vector<32x64xbf16>, vector<2x64xf32> -> vector<2x64xf32>
    %c0_21 = arith.constant 0 : index
    %c0_22 = arith.constant 0 : index
    %27 = vector.load %arg6[%c0_21, %c0_22] : memref<1x64xf32, #tpu.memory_space<vmem>>, vector<1x64xf32>
    %28 = vector.broadcast %27 : vector<1x64xf32> to vector<2x64xf32>
    %29 = arith.addf %26, %28 : vector<2x64xf32>
    %30 = vector.extract_strided_slice %29 {offsets = [0, 0], sizes = [2, 32], strides = [1, 1]} : vector<2x64xf32> to vector<2x32xf32>
    %31 = vector.extract_strided_slice %29 {offsets = [0, 32], sizes = [2, 32], strides = [1, 1]} : vector<2x64xf32> to vector<2x32xf32>
    %32 = vector.shape_cast %13 : vector<2x32xf32> to vector<2x1x32xf32>
    %33 = vector.broadcast %32 : vector<2x1x32xf32> to vector<2x64x32xf32>
    %34 = arith.mulf %33, %23 : vector<2x64x32xf32>
    %35 = vector.shape_cast %34 : vector<2x64x32xf32> to vector<128x32xf32>
    %cst_23 = arith.constant dense<0.000000e+00> : vector<128x4xf32>
    %36 = tpu.matmul %35, %2, %cst_23 {dimension_numbers = #tpu.dot_dimension_numbers<[1], [0], [0], [1], [0, 0, 1, 1], [], []>} : vector<128x32xf32>, vector<32x4xf32>, vector<128x4xf32> -> vector<128x4xf32>
    %37 = vector.shape_cast %36 : vector<128x4xf32> to vector<2x64x4xf32>
    %38 = arith.mulf %13, %30 : vector<2x32xf32>
    %cst_24 = arith.constant dense<0.000000e+00> : vector<2x4xf32>
    %39 = tpu.matmul %38, %2, %cst_24 {dimension_numbers = #tpu.dot_dimension_numbers<[1], [0], [0], [1], [0, 0, 1, 1], [], []>} : vector<2x32xf32>, vector<32x4xf32>, vector<2x4xf32> -> vector<2x4xf32>
    %cst_25 = arith.constant dense<0xFF800000> : vector<2x4xf32>
    %40 = vector.multi_reduction <maximumf>, %37, %cst_25 [1] : vector<2x64x4xf32> to vector<2x4xf32>
    %41 = arith.maximumf %40, %39 : vector<2x4xf32>
    %42 = vector.shape_cast %41 : vector<2x4xf32> to vector<2x1x4xf32>
    %43 = vector.broadcast %42 : vector<2x1x4xf32> to vector<2x64x4xf32>
    %44 = arith.subf %37, %43 : vector<2x64x4xf32>
    %45 = math.exp %44 : vector<2x64x4xf32>
    %46 = arith.subf %39, %41 : vector<2x4xf32>
    %47 = math.exp %46 : vector<2x4xf32>
    %cst_26 = arith.constant dense<0.000000e+00> : vector<2x4xf32>
    %48 = vector.multi_reduction <add>, %45, %cst_26 [1] : vector<2x64x4xf32> to vector<2x4xf32>
    %49 = arith.addf %48, %47 : vector<2x4xf32>
    %50 = tpu.reciprocal %49 {approx = true} : vector<2x4xf32> -> vector<2x4xf32>
    %51 = vector.shape_cast %50 : vector<2x4xf32> to vector<2x1x4xf32>
    %52 = vector.broadcast %51 : vector<2x1x4xf32> to vector<2x64x4xf32>
    %53 = arith.mulf %45, %52 : vector<2x64x4xf32>
    %54 = arith.mulf %47, %50 : vector<2x4xf32>
    %55 = vector.shape_cast %53 : vector<2x64x4xf32> to vector<128x4xf32>
    %cst_27 = arith.constant dense<0.000000e+00> : vector<128x32xf32>
    %56 = tpu.matmul %55, %3, %cst_27 {dimension_numbers = #tpu.dot_dimension_numbers<[1], [0], [0], [1], [0, 0, 1, 1], [], []>} : vector<128x4xf32>, vector<4x32xf32>, vector<128x32xf32> -> vector<128x32xf32>
    %57 = vector.shape_cast %56 : vector<128x32xf32> to vector<2x64x32xf32>
    %58 = arith.mulf %57, %24 : vector<2x64x32xf32>
    %cst_28 = arith.constant dense<0.000000e+00> : vector<2x32xf32>
    %59 = vector.multi_reduction <add>, %58, %cst_28 [1] : vector<2x64x32xf32> to vector<2x32xf32>
    %cst_29 = arith.constant dense<0.000000e+00> : vector<2x32xf32>
    %60 = tpu.matmul %54, %3, %cst_29 {dimension_numbers = #tpu.dot_dimension_numbers<[1], [0], [0], [1], [0, 0, 1, 1], [], []>} : vector<2x4xf32>, vector<4x32xf32>, vector<2x32xf32> -> vector<2x32xf32>
    %61 = arith.mulf %60, %31 : vector<2x32xf32>
    %62 = arith.addf %59, %61 : vector<2x32xf32>
    %63 = arith.truncf %62 : vector<2x32xf32> to vector<2x32xbf16>
    %c0_30 = arith.constant 0 : index
    %c0_31 = arith.constant 0 : index
    %64 = vector.load %arg7[%c0_30, %c0_31] : memref<32x128xbf16, #tpu.memory_space<vmem>>, vector<32x128xbf16>
    %cst_32 = arith.constant dense<0.000000e+00> : vector<2x128xf32>
    %65 = tpu.matmul %63, %64, %cst_32 {dimension_numbers = #tpu.dot_dimension_numbers<[1], [0], [0], [1], [0, 0, 1, 1], [], []>} : vector<2x32xbf16>, vector<32x128xbf16>, vector<2x128xf32> -> vector<2x128xf32>
    %c0_33 = arith.constant 0 : index
    %c0_34 = arith.constant 0 : index
    %66 = vector.load %arg8[%c0_33, %c0_34] : memref<1x128xf32, #tpu.memory_space<vmem>>, vector<1x128xf32>
    %67 = vector.broadcast %66 : vector<1x128xf32> to vector<2x128xf32>
    %68 = arith.addf %65, %67 : vector<2x128xf32>
    %c0_35 = arith.constant 0 : index
    %c0_36 = arith.constant 0 : index
    %c0_37 = arith.constant 0 : index
    %69 = vector.load %arg11[%c0_35, %c0_36, %c0_37] : memref<1x2x128xf32, #tpu.memory_space<vmem>>, vector<1x2x128xf32>
    %70 = vector.shape_cast %69 : vector<1x2x128xf32> to vector<2x128xf32>
    %71 = vector.shape_cast %68 : vector<2x128xf32> to vector<1x2x128xf32>
    tpu.vector_store %arg11[%c0_35, %c0_36, %c0_37], %71 {strides = array<i32>} : memref<1x2x128xf32, #tpu.memory_space<vmem>>, vector<1x2x128xf32>,
    return
  }
  func.func @transform_0(%arg0: i32) -> (i32, i32, i32, i32) {
    %c0_i32 = arith.constant 0 : i32
    %c0_i32_0 = arith.constant 0 : i32
    %c0_i32_1 = arith.constant 0 : i32
    %c0_i32_2 = arith.constant 0 : i32
    return %arg0, %c0_i32, %c0_i32_0, %c0_i32_1 : i32, i32, i32, i32
  }
  func.func @transform_1(%arg0: i32) -> (i32, i32) {
    %c0_i32 = arith.constant 0 : i32
    %c0_i32_0 = arith.constant 0 : i32
    %c0_i32_1 = arith.constant 0 : i32
    return %c0_i32, %c0_i32_0 : i32, i32
  }
  func.func @transform_2(%arg0: i32) -> (i32, i32) {
    %c0_i32 = arith.constant 0 : i32
    %c0_i32_0 = arith.constant 0 : i32
    %c0_i32_1 = arith.constant 0 : i32
    return %c0_i32, %c0_i32_0 : i32, i32
  }
  func.func @transform_3(%arg0: i32) -> (i32, i32) {
    %c0_i32 = arith.constant 0 : i32
    %c0_i32_0 = arith.constant 0 : i32
    %c0_i32_1 = arith.constant 0 : i32
    return %c0_i32, %c0_i32_0 : i32, i32
  }
  func.func @transform_4(%arg0: i32) -> (i32, i32) {
    %c0_i32 = arith.constant 0 : i32
    %c0_i32_0 = arith.constant 0 : i32
    %c0_i32_1 = arith.constant 0 : i32
    return %c0_i32, %c0_i32_0 : i32, i32
  }
  func.func @transform_5(%arg0: i32) -> (i32, i32) {
    %c0_i32 = arith.constant 0 : i32
    %c0_i32_0 = arith.constant 0 : i32
    %c0_i32_1 = arith.constant 0 : i32
    return %c0_i32, %c0_i32_0 : i32, i32
  }
  func.func @transform_6(%arg0: i32) -> (i32, i32) {
    %c0_i32 = arith.constant 0 : i32
    %c0_i32_0 = arith.constant 0 : i32
    %c0_i32_1 = arith.constant 0 : i32
    return %c0_i32, %c0_i32_0 : i32, i32
  }
  func.func @transform_7(%arg0: i32) -> (i32, i32) {
    %c0_i32 = arith.constant 0 : i32
    %c0_i32_0 = arith.constant 0 : i32
    %c0_i32_1 = arith.constant 0 : i32
    return %c0_i32, %c0_i32_0 : i32, i32
  }
  func.func @transform_8(%arg0: i32) -> (i32, i32) {
    %c0_i32 = arith.constant 0 : i32
    %c0_i32_0 = arith.constant 0 : i32
    %c0_i32_1 = arith.constant 0 : i32
    return %c0_i32, %c0_i32_0 : i32, i32
  }
  func.func @transform_9(%arg0: i32) -> (i32, i32) {
    %c0_i32 = arith.constant 0 : i32
    %c0_i32_0 = arith.constant 0 : i32
    %c0_i32_1 = arith.constant 0 : i32
    return %c0_i32, %c0_i32_0 : i32, i32
  }
  func.func @transform_10(%arg0: i32) -> (i32, i32, i32) {
    %c0_i32 = arith.constant 0 : i32
    %c0_i32_0 = arith.constant 0 : i32
    %c0_i32_1 = arith.constant 0 : i32
    return %arg0, %c0_i32, %c0_i32_0 : i32, i32, i32
  }
}

</mosaic_0001>

<llo_original>
// kernel: tpu_custom_call.1
$region0: #{tpu_custom_call.1}
  #allocation0 [shape = 'u32[]', space=smem, size = 0x4, offset = 0x4, fixed_abs, tag = 'smem constant byte address 0x4 - core index']
  #allocation1 [shape = 'u32[144,128]{1,0:T(1,128)}', space=vmem, size = 0x12000, scoped, tag = 'internal scratch']
  %s0 = inlined_call_operand.vmem [shape: bf16[1,2,32,64], index: 0, kind: input, shape index: {}]
  %s1 = inlined_call_operand.hbm [shape: bf16[32,32], index: 1, kind: input, shape index: {}]
  %s2 = inlined_call_operand.vmem [shape: f32[1,32], index: 2, kind: input, shape index: {}]
  %s3 = inlined_call_operand.hbm [shape: bf16[32,64], index: 3, kind: input, shape index: {}]
  %s4 = inlined_call_operand.hbm [shape: f32[64,64], index: 4, kind: input, shape index: {}]
  %s5 = inlined_call_operand.vmem [shape: f32[1,64], index: 5, kind: input, shape index: {}]
  %s6 = inlined_call_operand.vmem [shape: bf16[32,128], index: 6, kind: input, shape index: {}]
  %s7 = inlined_call_operand.vmem [shape: f32[1,128], index: 7, kind: input, shape index: {}]
  %s8 = inlined_call_operand.vmem [shape: f32[32,4], index: 8, kind: input, shape index: {}]
  %s9 = inlined_call_operand.vmem [shape: f32[4,32], index: 9, kind: input, shape index: {}]
  %s10 = inlined_call_operand.hbm [shape: f32[1,2,128], index: 10, kind: output, shape index: {}]
  %s11 = sld [smem:[#allocation0]]
  $region62: #{tpu_custom_call.1} parent=0
    _
  %s13 = ssub.s32 1, %s11
  %s14 = scalar_select 0, %s13, %s11
  $region1: #{tpu_custom_call.1} parent=0
    #allocation2 [shape = 'u8[8192]{0}', space=vmem, size = 0x2000, scoped, tag = 'input window, operand 1, single buffered']
    #allocation3 [shape = 's32[1]{0}', space=sflag, size = 0x4, scoped, tag = 'scoped memory for tpu_custom_call.1']
    #allocation4 [shape = 's32[1]{0}', space=sflag, size = 0x4, scoped, tag = 'scoped memory for tpu_custom_call.1']
    #allocation5 [shape = 'u8[8192]{0}', space=vmem, size = 0x2000, scoped, tag = 'input window, operand 3, single buffered']
    #allocation6 [shape = 's32[1]{0}', space=sflag, size = 0x4, scoped, tag = 'scoped memory for tpu_custom_call.1']
    #allocation7 [shape = 'u8[32768]{0}', space=vmem, size = 0x8000, scoped, tag = 'input window, operand 4, single buffered']
    #allocation8 [shape = 'u8[1024]{0}', space=vmem, size = 0x400, scoped, tag = 'output window, operand 0, single buffered']
    %15 = vsyncpa [#allocation3], 0
    %16 = vsyncpa [#allocation6], 0
    %17 = vsyncpa [#allocation4], 0
    // Predicated region
    $region2: #{tpu_custom_call.1} parent=1 // pred_check
      _
    $region3: #{tpu_custom_call.1} parent=1 // pred_check_branch
      %19 = sbr.rel (0) target = $region5
    $region4: #{tpu_custom_call.1} parent=1 // pred_region
      _
    $region5: #{tpu_custom_call.1} parent=1 // pred_fallthru
      _
    // Predicated region
    $region6: #{tpu_custom_call.1} parent=1 // pred_check
      _
    $region7: #{tpu_custom_call.1} parent=1 // pred_check_branch
      %21 = sbr.rel (0) target = $region9
    $region8: #{tpu_custom_call.1} parent=1 // pred_region
      %s23 = ssub.s32 256, 256
      %24 = vsyncadd [#allocation3], %s23
      %s25 = sshll.u32 [#allocation2], 4
      %s26 = int_to_ptr.vmem [resolvable:$true] %s25
      %31 = dma.hbm_to_vmem [thread:$0]  %s1, 256, %s26, [#allocation3], 64, 64, 4
    $region9: #{tpu_custom_call.1} parent=1 // pred_fallthru
      _
    // Predicated region
    $region10: #{tpu_custom_call.1} parent=1 // pred_check
      _
    $region11: #{tpu_custom_call.1} parent=1 // pred_check_branch
      %33 = sbr.rel (0) target = $region13
    $region12: #{tpu_custom_call.1} parent=1 // pred_region
      _
    $region13: #{tpu_custom_call.1} parent=1 // pred_fallthru
      _
    // Predicated region
    $region14: #{tpu_custom_call.1} parent=1 // pred_check
      _
    $region15: #{tpu_custom_call.1} parent=1 // pred_check_branch
      %35 = sbr.rel (0) target = $region17
    $region16: #{tpu_custom_call.1} parent=1 // pred_region
      %s37 = ssub.s32 256, 256
      %38 = vsyncadd [#allocation6], %s37
      %s39 = sshll.u32 [#allocation5], 4
      %s40 = int_to_ptr.vmem [resolvable:$true] %s39
      %45 = dma.hbm_to_vmem [thread:$0]  %s3, 256, %s40, [#allocation6], 64, 64, 4
    $region17: #{tpu_custom_call.1} parent=1 // pred_fallthru
      _
    // Predicated region
    $region18: #{tpu_custom_call.1} parent=1 // pred_check
      _
    $region19: #{tpu_custom_call.1} parent=1 // pred_check_branch
      %47 = sbr.rel (0) target = $region21
    $region20: #{tpu_custom_call.1} parent=1 // pred_region
      %s49 = ssub.s32 1024, 1024
      %50 = vsyncadd [#allocation6], %s49
      %s51 = sshll.u32 [#allocation7], 4
      %s52 = int_to_ptr.vmem [resolvable:$true] %s51
      %57 = dma.hbm_to_vmem [thread:$0]  %s4, 1024, %s52, [#allocation6], 128, 128, 8
    $region21: #{tpu_custom_call.1} parent=1 // pred_fallthru
      _
    // Predicated region
    $region22: #{tpu_custom_call.1} parent=1 // pred_check
      _
    $region23: #{tpu_custom_call.1} parent=1 // pred_check_branch
      %59 = sbr.rel (0) target = $region25
    $region24: #{tpu_custom_call.1} parent=1 // pred_region
      _
    $region25: #{tpu_custom_call.1} parent=1 // pred_fallthru
      _
    // Predicated region
    $region26: #{tpu_custom_call.1} parent=1 // pred_check
      _
    $region27: #{tpu_custom_call.1} parent=1 // pred_check_branch
      %61 = sbr.rel (0) target = $region29
    $region28: #{tpu_custom_call.1} parent=1 // pred_region
      _
    $region29: #{tpu_custom_call.1} parent=1 // pred_fallthru
      _
    // Predicated region
    $region30: #{tpu_custom_call.1} parent=1 // pred_check
      _
    $region31: #{tpu_custom_call.1} parent=1 // pred_check_branch
      %63 = sbr.rel (0) target = $region33
    $region32: #{tpu_custom_call.1} parent=1 // pred_region
      _
    $region33: #{tpu_custom_call.1} parent=1 // pred_fallthru
      _
    // Predicated region
    $region34: #{tpu_custom_call.1} parent=1 // pred_check
      _
    $region35: #{tpu_custom_call.1} parent=1 // pred_check_branch
      %65 = sbr.rel (0) target = $region37
    $region36: #{tpu_custom_call.1} parent=1 // pred_region
      _
    $region37: #{tpu_custom_call.1} parent=1 // pred_fallthru
      _
    // Predicated region
    $region38: #{tpu_custom_call.1} parent=1 // pred_check
      _
    $region39: #{tpu_custom_call.1} parent=1 // pred_check_branch
      %67 = sbr.rel (0) target = $region41
    $region40: #{tpu_custom_call.1} parent=1 // pred_region
      _
    $region41: #{tpu_custom_call.1} parent=1 // pred_fallthru
      _
    // Predicated region
    $region42: #{tpu_custom_call.1} parent=1 // pred_check
      _
    $region43: #{tpu_custom_call.1} parent=1 // pred_check_branch
      %69 = sbr.rel (0) target = $region45
    $region44: #{tpu_custom_call.1} parent=1 // pred_region
      %70 = dma.done [#allocation3], 256
    $region45: #{tpu_custom_call.1} parent=1 // pred_fallthru
      _
    // Predicated region
    $region46: #{tpu_custom_call.1} parent=1 // pred_check
      _
    $region47: #{tpu_custom_call.1} parent=1 // pred_check_branch
      %72 = sbr.rel (0) target = $region49
    $region48: #{tpu_custom_call.1} parent=1 // pred_region
      %73 = dma.done [#allocation6], 256
    $region49: #{tpu_custom_call.1} parent=1 // pred_fallthru
      _
    // Predicated region
    $region50: #{tpu_custom_call.1} parent=1 // pred_check
      _
    $region51: #{tpu_custom_call.1} parent=1 // pred_check_branch
      %75 = sbr.rel (0) target = $region53
    $region52: #{tpu_custom_call.1} parent=1 // pred_region
      %76 = dma.done [#allocation6], 1024
    $region53: #{tpu_custom_call.1} parent=1 // pred_fallthru
      _
    %v78 = vld [vmem:[%s0] sm:$0xf]
    %v79 = vld [vmem:[%s0 + $0x4] sm:$0xf]
    %v80 = vld [vmem:[%s0 + $0x8] sm:$0xf]
    %v81 = vld [vmem:[%s0 + $0xc] sm:$0xf]
    %v82 = vld [vmem:[%s0 + $0x10] sm:$0xf]
    %v83 = vld [vmem:[%s0 + $0x14] sm:$0xf]
    %v84 = vld [vmem:[%s0 + $0x18] sm:$0xf]
    %v85 = vld [vmem:[%s0 + $0x1c] sm:$0xf]
    %v86 = vld [vmem:[%s8] sm:$0xff]
    %v87 = vld [vmem:[%s8 + $0x8] sm:$0xff]
    %v88 = vld [vmem:[%s8 + $0x10] sm:$0xff]
    %v89 = vld [vmem:[%s8 + $0x18] sm:$0xff]
    %v90 = vld [vmem:[%s9] sm:$0xf]
    %v91 = vunpack.c.l.bf16 %v78
    %v92 = vunpack.c.l.bf16 %v79
    %v93 = vunpack.c.l.bf16 %v80
    %v94 = vunpack.c.l.bf16 %v81
    %v95 = vunpack.c.l.bf16 %v82
    %v96 = vunpack.c.l.bf16 %v83
    %v97 = vunpack.c.l.bf16 %v84
    %v98 = vunpack.c.l.bf16 %v85
    %vm99 = vcmask 523264
    %v100 = vsel %vm99, %v91, 0.0
    %101 = vadd.xlane.f32.xlu0 %v100
    %v102 = vpop.xlane.xlu0 %101
    %v103 = vsel %vm99, %v92, 0.0
    %104 = vadd.xlane.f32.xlu0 %v103
    %v105 = vpop.xlane.xlu0 %104
    %v106 = vsel %vm99, %v93, 0.0
    %107 = vadd.xlane.f32.xlu0 %v106
    %v108 = vpop.xlane.xlu0 %107
    %v109 = vsel %vm99, %v94, 0.0
    %110 = vadd.xlane.f32.xlu0 %v109
    %v111 = vpop.xlane.xlu0 %110
    %v112 = vsel %vm99, %v95, 0.0
    %113 = vadd.xlane.f32.xlu0 %v112
    %v114 = vpop.xlane.xlu0 %113
    %v115 = vsel %vm99, %v96, 0.0
    %116 = vadd.xlane.f32.xlu0 %v115
    %v117 = vpop.xlane.xlu0 %116
    %v118 = vsel %vm99, %v97, 0.0
    %119 = vadd.xlane.f32.xlu0 %v118
    %v120 = vpop.xlane.xlu0 %119
    %v121 = vsel %vm99, %v98, 0.0
    %122 = vadd.xlane.f32.xlu0 %v121
    %v123 = vpop.xlane.xlu0 %122
    %v124 = vrcp.pop 64.0
    %v125 = vmul.f32 %v102, %v124
    %v126 = vmul.f32 %v105, %v124
    %v127 = vmul.f32 %v108, %v124
    %v128 = vmul.f32 %v111, %v124
    %v129 = vmul.f32 %v114, %v124
    %v130 = vmul.f32 %v117, %v124
    %v131 = vmul.f32 %v120, %v124
    %v132 = vmul.f32 %v123, %v124
    %v133 = vpack.c.bf16 %v126, %v125
    %v134 = vpack.c.bf16 %v128, %v127
    %v135 = vpack.c.bf16 %v130, %v129
    %v136 = vpack.c.bf16 %v132, %v131
    %v137 = vld [vmem:[#allocation2] sm:$0xf]
    %v138 = vld [vmem:[#allocation2 + $0x4] sm:$0xf]
    %v139 = vld [vmem:[#allocation2 + $0x8] sm:$0xf]
    %v140 = vld [vmem:[#allocation2 + $0xc] sm:$0xf]
    %v141 = vld [vmem:[%s2] sm:$0x1]
    %v143 = vlaneseq
    %v144 = vshrl.u32 %v143, 7
    %v145 = vsub.s32 0, %v144
    %v146 = vrot.slane %v141, %v145
    %v152 = vunpack.c.l.b16 %v133
    %v153 = vunpack.c.h.b16 %v133
    %v154 = vunpack.c.l.b16 %v134
    %v155 = vunpack.c.h.b16 %v134
    %v156 = vunpack.c.l.b16 %v135
    %v157 = vunpack.c.h.b16 %v135
    %v158 = vunpack.c.l.b16 %v136
    %v159 = vunpack.c.h.b16 %v136
    %v160 = vlaneseq
    %v161 = vand.u32 %v160, 127
    %v162 = vlaneseq
    %v163 = vshrl.u32 %v162, 7
    %v164 = vsub.s32 %v161, %v163
    %v165 = vrot.slane %v152, %v164
    %v166 = vadd.s32 %v161, 4294967288
    %v167 = vlaneseq
    %v168 = vshrl.u32 %v167, 7
    %v169 = vsub.s32 %v166, %v168
    %v170 = vrot.slane %v153, %v169
    %vm171 = vcmask 130112
    %v172 = vsel %vm171, %v170, %v165
    %v173 = vadd.s32 %v161, 4294967280
    %v174 = vlaneseq
    %v175 = vshrl.u32 %v174, 7
    %v176 = vsub.s32 %v173, %v175
    %v177 = vrot.slane %v154, %v176
    %vm178 = vcmask 195712
    %v179 = vsel %vm178, %v177, %v172
    %v180 = vadd.s32 %v161, 4294967272
    %v181 = vlaneseq
    %v182 = vshrl.u32 %v181, 7
    %v183 = vsub.s32 %v180, %v182
    %v184 = vrot.slane %v155, %v183
    %vm185 = vcmask 261312
    %v186 = vsel %vm185, %v184, %v179
    %v187 = vlaneseq
    %v188 = vshrl.u32 %v187, 7
    %v189 = vsub.s32 %v161, %v188
    %v190 = vrot.slane %v156, %v189
    %v191 = vlaneseq
    %v192 = vshrl.u32 %v191, 7
    %v193 = vsub.s32 %v166, %v192
    %v194 = vrot.slane %v157, %v193
    %v195 = vsel %vm171, %v194, %v190
    %v196 = vlaneseq
    %v197 = vshrl.u32 %v196, 7
    %v198 = vsub.s32 %v173, %v197
    %v199 = vrot.slane %v158, %v198
    %v200 = vsel %vm178, %v199, %v195
    %v201 = vlaneseq
    %v202 = vshrl.u32 %v201, 7
    %v203 = vsub.s32 %v180, %v202
    %v204 = vrot.slane %v159, %v203
    %v205 = vsel %vm185, %v204, %v200
    %vm206 = vcmask 1041409
    %v207 = vsel %vm206, %v205, %v186
    %v208 = vpack.c.b16 %v207, %v207
    %v213 = vunpack.c.l.b16 %v137
    %v214 = vunpack.c.l.b16 %v138
    %v215 = vunpack.c.l.b16 %v139
    %v216 = vunpack.c.l.b16 %v140
    %v217 = vpack.c.b16 %v214, %v213
    %v218 = vpack.c.b16 %v216, %v215
    %vm221 = vcmask 261120
    %v223 = vsel %vm221, %v208, 0
    %225 = vmatprep.subr.bf16.mxu0 0
    %226 = vmatpush1.bf16.msra.mxu0 %v217
    %227 = vmatprep.subr.bf16.mxu0 0
    %228 = vmatpush1.bf16.msra.mxu0 %v218
    %229 = vmatprep.subr.bf16.mxu0 0
    %230 = vmatpush1.bf16.msra.mxu0 0
    %231 = vmatprep.subr.bf16.mxu0 0
    %232 = vmatpush1.bf16.msra.mxu0 0
    %233 = vmatprep.subr.bf16.mxu0 0
    %234 = vmatpush1.bf16.msra.mxu0 0
    %235 = vmatprep.subr.bf16.mxu0 0
    %236 = vmatpush1.bf16.msra.mxu0 0
    %237 = vmatprep.subr.bf16.mxu0 0
    %238 = vmatpush1.bf16.msra.mxu0 0
    %239 = vmatprep.subr.bf16.mxu0 0
    %240 = vmatpush1.bf16.msra.mxu0 0
    %241 = vmatprep.subr.bf16.mxu0 0
    %242 = vmatpush1.bf16.msra.mxu0 0
    %243 = vmatprep.subr.bf16.mxu0 0
    %244 = vmatpush1.bf16.msra.mxu0 0
    %245 = vmatprep.subr.bf16.mxu0 0
    %246 = vmatpush1.bf16.msra.mxu0 0
    %247 = vmatprep.subr.bf16.mxu0 0
    %248 = vmatpush1.bf16.msra.mxu0 0
    %249 = vmatprep.subr.bf16.mxu0 0
    %250 = vmatpush1.bf16.msra.mxu0 0
    %251 = vmatprep.subr.bf16.mxu0 0
    %252 = vmatpush1.bf16.msra.mxu0 0
    %253 = vmatprep.subr.bf16.mxu0 0
    %254 = vmatpush1.bf16.msra.mxu0 0
    %255 = vmatprep.subr.bf16.mxu0 0
    %256 = vmatpush1.bf16.msra.mxu0 0
    %257 = vmatprep.mubr.bf16.mxu0 0
    %258 = vmatmul.mubr.bf16.gmra.mrb[0].mxu0 %v223
    %v259 = vpop.f32.mrb[0].mxu0
    %v260 = vadd.f32 %v146, %v259
    %v261 = vpop.f32.mrb[0].mxu0
    %v262 = vpop.f32.mrb[0].mxu0
    %v263 = vpop.f32.mrb[0].mxu0
    %264 = vdwg.mxu0
    %v273 = vunpack.c.l.b16 %v78
    %v274 = vunpack.c.l.b16 %v79
    %v275 = vunpack.c.l.b16 %v80
    %v276 = vunpack.c.l.b16 %v81
    %v277 = vunpack.c.l.b16 %v82
    %v278 = vunpack.c.l.b16 %v83
    %v279 = vunpack.c.l.b16 %v84
    %v280 = vunpack.c.l.b16 %v85
    %v281 = vpack.c.b16 %v274, %v273
    %v282 = vpack.c.b16 %v276, %v275
    %v283 = vpack.c.b16 %v278, %v277
    %v284 = vpack.c.b16 %v280, %v279
    %289 = vxpose.xlu0.c.b16.start [1/8] %v281, 128
    %290 = vxpose.xlu0.c.b16.cont [2/8] %v282, 128
    %291 = vxpose.xlu0.c.b16.cont [3/8] 0, 128
    %292 = vxpose.xlu0.c.b16.cont [4/8] 0, 128
    %293 = vxpose.xlu0.c.b16.cont [5/8] 0, 128
    %294 = vxpose.xlu0.c.b16.cont [6/8] 0, 128
    %295 = vxpose.xlu0.c.b16.cont [7/8] 0, 128
    %296 = vxpose.xlu0.c.b16.end [8/8] 0, 128
    %v297 = vpop.trf.xlu0
    %v298 = vpop.trf.xlu0
    %v299 = vpop.trf.xlu0
    %v300 = vpop.trf.xlu0
    %v301 = vpop.trf.xlu0
    %v302 = vpop.trf.xlu0
    %v303 = vpop.trf.xlu0
    %v304 = vpop.trf.xlu0
    %305 = vxpose.xlu0.c.b16.start [1/8] %v283, 128
    %306 = vxpose.xlu0.c.b16.cont [2/8] %v284, 128
    %307 = vxpose.xlu0.c.b16.cont [3/8] 0, 128
    %308 = vxpose.xlu0.c.b16.cont [4/8] 0, 128
    %309 = vxpose.xlu0.c.b16.cont [5/8] 0, 128
    %310 = vxpose.xlu0.c.b16.cont [6/8] 0, 128
    %311 = vxpose.xlu0.c.b16.cont [7/8] 0, 128
    %312 = vxpose.xlu0.c.b16.end [8/8] 0, 128
    %v313 = vpop.trf.xlu0
    %v314 = vpop.trf.xlu0
    %v315 = vpop.trf.xlu0
    %v316 = vpop.trf.xlu0
    %v317 = vpop.trf.xlu0
    %v318 = vpop.trf.xlu0
    %v319 = vpop.trf.xlu0
    %v320 = vpop.trf.xlu0
    %v321 = vld [vmem:[#allocation5] sm:$0xf]
    %v322 = vld [vmem:[#allocation5 + $0x4] sm:$0xf]
    %v323 = vld [vmem:[#allocation5 + $0x8] sm:$0xf]
    %v324 = vld [vmem:[#allocation5 + $0xc] sm:$0xf]
    %v329 = vunpack.c.l.b16 %v321
    %v330 = vunpack.c.l.b16 %v322
    %v331 = vunpack.c.l.b16 %v323
    %v332 = vunpack.c.l.b16 %v324
    %v333 = vpack.c.b16 %v330, %v329
    %v334 = vpack.c.b16 %v332, %v331
    %v338 = vsel %vm221, %v297, 0
    %v341 = vsel %vm221, %v298, 0
    %v344 = vsel %vm221, %v299, 0
    %v347 = vsel %vm221, %v300, 0
    %v350 = vsel %vm221, %v313, 0
    %v353 = vsel %vm221, %v314, 0
    %v356 = vsel %vm221, %v315, 0
    %v359 = vsel %vm221, %v316, 0
    %361 = vmatprep.subr.bf16.mxu0 0
    %362 = vmatpush1.bf16.msra.mxu0 %v333
    %363 = vmatprep.subr.bf16.mxu0 0
    %364 = vmatpush1.bf16.msra.mxu0 %v334
    %365 = vmatprep.subr.bf16.mxu0 0
    %366 = vmatpush1.bf16.msra.mxu0 0
    %367 = vmatprep.subr.bf16.mxu0 0
    %368 = vmatpush1.bf16.msra.mxu0 0
    %369 = vmatprep.subr.bf16.mxu0 0
    %370 = vmatpush1.bf16.msra.mxu0 0
    %371 = vmatprep.subr.bf16.mxu0 0
    %372 = vmatpush1.bf16.msra.mxu0 0
    %373 = vmatprep.subr.bf16.mxu0 0
    %374 = vmatpush1.bf16.msra.mxu0 0
    %375 = vmatprep.subr.bf16.mxu0 0
    %376 = vmatpush1.bf16.msra.mxu0 0
    %377 = vmatprep.subr.bf16.mxu0 0
    %378 = vmatpush1.bf16.msra.mxu0 0
    %379 = vmatprep.subr.bf16.mxu0 0
    %380 = vmatpush1.bf16.msra.mxu0 0
    %381 = vmatprep.subr.bf16.mxu0 0
    %382 = vmatpush1.bf16.msra.mxu0 0
    %383 = vmatprep.subr.bf16.mxu0 0
    %384 = vmatpush1.bf16.msra.mxu0 0
    %385 = vmatprep.subr.bf16.mxu0 0
    %386 = vmatpush1.bf16.msra.mxu0 0
    %387 = vmatprep.subr.bf16.mxu0 0
    %388 = vmatpush1.bf16.msra.mxu0 0
    %389 = vmatprep.subr.bf16.mxu0 0
    %390 = vmatpush1.bf16.msra.mxu0 0
    %391 = vmatprep.subr.bf16.mxu0 0
    %392 = vmatpush1.bf16.msra.mxu0 0
    %393 = vmatprep.mubr.bf16.mxu0 0
    %394 = vmatmul.mubr.bf16.gmra.mrb[0].mxu0 %v338
    %v395 = vpop.f32.mrb[0].mxu0
    %v396 = vadd.f32 0.0, %v395
    %v397 = vpop.f32.mrb[0].mxu0
    %v398 = vpop.f32.mrb[0].mxu0
    %v399 = vadd.f32 0.0, %v398
    %v400 = vpop.f32.mrb[0].mxu0
    %401 = vmatprep.mubr.bf16.mxu0 0
    %402 = vmatmul.mubr.bf16.gmra.mrb[0].mxu0 %v341
    %v403 = vpop.f32.mrb[0].mxu0
    %v404 = vadd.f32 0.0, %v403
    %v405 = vpop.f32.mrb[0].mxu0
    %v406 = vpop.f32.mrb[0].mxu0
    %v407 = vadd.f32 0.0, %v406
    %v408 = vpop.f32.mrb[0].mxu0
    %409 = vmatprep.mubr.bf16.mxu0 0
    %410 = vmatmul.mubr.bf16.gmra.mrb[0].mxu0 %v344
    %v411 = vpop.f32.mrb[0].mxu0
    %v412 = vadd.f32 0.0, %v411
    %v413 = vpop.f32.mrb[0].mxu0
    %v414 = vpop.f32.mrb[0].mxu0
    %v415 = vadd.f32 0.0, %v414
    %v416 = vpop.f32.mrb[0].mxu0
    %417 = vmatprep.mubr.bf16.mxu0 0
    %418 = vmatmul.mubr.bf16.gmra.mrb[0].mxu0 %v347
    %v419 = vpop.f32.mrb[0].mxu0
    %v420 = vadd.f32 0.0, %v419
    %v421 = vpop.f32.mrb[0].mxu0
    %v422 = vpop.f32.mrb[0].mxu0
    %v423 = vadd.f32 0.0, %v422
    %v424 = vpop.f32.mrb[0].mxu0
    %425 = vmatprep.mubr.bf16.mxu0 0
    %426 = vmatmul.mubr.bf16.gmra.mrb[0].mxu0 %v350
    %v427 = vpop.f32.mrb[0].mxu0
    %v428 = vadd.f32 0.0, %v427
    %v429 = vpop.f32.mrb[0].mxu0
    %v430 = vpop.f32.mrb[0].mxu0
    %v431 = vadd.f32 0.0, %v430
    %v432 = vpop.f32.mrb[0].mxu0
    %433 = vmatprep.mubr.bf16.mxu0 0
    %434 = vmatmul.mubr.bf16.gmra.mrb[0].mxu0 %v353
    %v435 = vpop.f32.mrb[0].mxu0
    %v436 = vadd.f32 0.0, %v435
    %v437 = vpop.f32.mrb[0].mxu0
    %v438 = vpop.f32.mrb[0].mxu0
    %v439 = vadd.f32 0.0, %v438
    %v440 = vpop.f32.mrb[0].mxu0
    %441 = vmatprep.mubr.bf16.mxu0 0
    %442 = vmatmul.mubr.bf16.gmra.mrb[0].mxu0 %v356
    %v443 = vpop.f32.mrb[0].mxu0
    %v444 = vadd.f32 0.0, %v443
    %v445 = vpop.f32.mrb[0].mxu0
    %v446 = vpop.f32.mrb[0].mxu0
    %v447 = vadd.f32 0.0, %v446
    %v448 = vpop.f32.mrb[0].mxu0
    %449 = vmatprep.mubr.bf16.mxu0 0
    %450 = vmatmul.mubr.bf16.gmra.mrb[0].mxu0 %v359
    %v451 = vpop.f32.mrb[0].mxu0
    %v452 = vadd.f32 0.0, %v451
    %v453 = vpop.f32.mrb[0].mxu0
    %v454 = vpop.f32.mrb[0].mxu0
    %v455 = vadd.f32 0.0, %v454
    %v456 = vpop.f32.mrb[0].mxu0
    %457 = vdwg.mxu0
    %v458 = vld [vmem:[#allocation7] sm:$0xff]
    %v459 = vld [vmem:[#allocation7 + $0x8] sm:$0xff]
    %v460 = vld [vmem:[#allocation7 + $0x10] sm:$0xff]
    %v461 = vld [vmem:[#allocation7 + $0x18] sm:$0xff]
    %v462 = vld [vmem:[#allocation7 + $0x20] sm:$0xff]
    %v463 = vld [vmem:[#allocation7 + $0x28] sm:$0xff]
    %v464 = vld [vmem:[#allocation7 + $0x30] sm:$0xff]
    %v465 = vld [vmem:[#allocation7 + $0x38] sm:$0xff]
    %v466 = vadd.f32 %v396, %v458
    %v467 = vadd.f32 %v399, %v459
    %v468 = vadd.f32 %v404, %v460
    %v469 = vadd.f32 %v407, %v461
    %v470 = vadd.f32 %v412, %v462
    %v471 = vadd.f32 %v415, %v463
    %v472 = vadd.f32 %v420, %v464
    %v473 = vadd.f32 %v423, %v465
    %v474 = vadd.f32 %v428, %v458
    %v475 = vadd.f32 %v431, %v459
    %v476 = vadd.f32 %v436, %v460
    %v477 = vadd.f32 %v439, %v461
    %v478 = vadd.f32 %v444, %v462
    %v479 = vadd.f32 %v447, %v463
    %v480 = vadd.f32 %v452, %v464
    %v481 = vadd.f32 %v455, %v465
    %v482 = vld [vmem:[%s5] sm:$0x1]
    %v484 = vlaneseq
    %v485 = vshrl.u32 %v484, 7
    %v486 = vsub.s32 0, %v485
    %v487 = vrot.slane %v482, %v486
    %489 = vmatprep.subr.bf16.mxu0 0
    %490 = vmatpush1.bf16.msra.mxu0 %v333
    %491 = vmatprep.subr.bf16.mxu0 0
    %492 = vmatpush1.bf16.msra.mxu0 %v334
    %493 = vmatprep.subr.bf16.mxu0 0
    %494 = vmatpush1.bf16.msra.mxu0 0
    %495 = vmatprep.subr.bf16.mxu0 0
    %496 = vmatpush1.bf16.msra.mxu0 0
    %497 = vmatprep.subr.bf16.mxu0 0
    %498 = vmatpush1.bf16.msra.mxu0 0
    %499 = vmatprep.subr.bf16.mxu0 0
    %500 = vmatpush1.bf16.msra.mxu0 0
    %501 = vmatprep.subr.bf16.mxu0 0
    %502 = vmatpush1.bf16.msra.mxu0 0
    %503 = vmatprep.subr.bf16.mxu0 0
    %504 = vmatpush1.bf16.msra.mxu0 0
    %505 = vmatprep.subr.bf16.mxu0 0
    %506 = vmatpush1.bf16.msra.mxu0 0
    %507 = vmatprep.subr.bf16.mxu0 0
    %508 = vmatpush1.bf16.msra.mxu0 0
    %509 = vmatprep.subr.bf16.mxu0 0
    %510 = vmatpush1.bf16.msra.mxu0 0
    %511 = vmatprep.subr.bf16.mxu0 0
    %512 = vmatpush1.bf16.msra.mxu0 0
    %513 = vmatprep.subr.bf16.mxu0 0
    %514 = vmatpush1.bf16.msra.mxu0 0
    %515 = vmatprep.subr.bf16.mxu0 0
    %516 = vmatpush1.bf16.msra.mxu0 0
    %517 = vmatprep.subr.bf16.mxu0 0
    %518 = vmatpush1.bf16.msra.mxu0 0
    %519 = vmatprep.subr.bf16.mxu0 0
    %520 = vmatpush1.bf16.msra.mxu0 0
    %521 = vmatprep.mubr.bf16.mxu0 0
    %522 = vmatmul.mubr.bf16.gmra.mrb[0].mxu0 %v223
    %v523 = vpop.f32.mrb[0].mxu0
    %v524 = vadd.f32 %v487, %v523
    %v525 = vpop.f32.mrb[0].mxu0
    %v526 = vpop.f32.mrb[0].mxu0
    %v527 = vpop.f32.mrb[0].mxu0
    %528 = vdwg.mxu0
    %v531 = vunpack.c.l.s4 1966171168
    %v532 = vunpack.c.0.s8 %v531
    %v533 = vlaneseq
    %v534 = vshrl.u32 %v533, 7
    %v535 = vsub.s32 %v532, %v534
    %v536 = vrot.slane %v260, %v535
    %v537 = vcombine.high %v536, %v536
    %v539 = vunpack.c.l.s4 1966171168
    %v540 = vunpack.c.0.s8 %v539
    %v541 = vlaneseq
    %v542 = vshrl.u32 %v541, 7
    %v543 = vsub.s32 %v540, %v542
    %v544 = vrot.slane %v536, %v543
    %v546 = vunpack.c.l.s4 1966171168
    %v547 = vunpack.c.0.s8 %v546
    %v548 = vlaneseq
    %v549 = vshrl.u32 %v548, 7
    %v550 = vsub.s32 %v547, %v549
    %v551 = vrot.slane %v537, %v550
    %v552 = vlaneseq
    %v553 = vshrl.u32 %v552, 7
    %v554 = vsub.s32 0, %v553
    %v555 = vrot.slane %v544, %v554
    %v556 = vlaneseq
    %v557 = vshrl.u32 %v556, 7
    %v558 = vsub.s32 0, %v557
    %v559 = vrot.slane %v551, %v558
    %v562 = vmul.f32 %v555, %v466
    %v563 = vmul.f32 %v555, %v467
    %v564 = vmul.f32 %v555, %v468
    %v565 = vmul.f32 %v555, %v469
    %v566 = vmul.f32 %v555, %v470
    %v567 = vmul.f32 %v555, %v471
    %v568 = vmul.f32 %v555, %v472
    %v569 = vmul.f32 %v555, %v473
    %v570 = vmul.f32 %v559, %v474
    %v571 = vmul.f32 %v559, %v475
    %v572 = vmul.f32 %v559, %v476
    %v573 = vmul.f32 %v559, %v477
    %v574 = vmul.f32 %v559, %v478
    %v575 = vmul.f32 %v559, %v479
    %v576 = vmul.f32 %v559, %v480
    %v577 = vmul.f32 %v559, %v481
    %v579 = vsel %vm221, %v562, 0
    %v582 = vsel %vm221, %v563, 0
    %v585 = vsel %vm221, %v564, 0
    %v588 = vsel %vm221, %v565, 0
    %v591 = vsel %vm221, %v566, 0
    %v594 = vsel %vm221, %v567, 0
    %v597 = vsel %vm221, %v568, 0
    %v600 = vsel %vm221, %v569, 0
    %v603 = vsel %vm221, %v570, 0
    %v606 = vsel %vm221, %v571, 0
    %v609 = vsel %vm221, %v572, 0
    %v612 = vsel %vm221, %v573, 0
    %v615 = vsel %vm221, %v574, 0
    %v618 = vsel %vm221, %v575, 0
    %v621 = vsel %vm221, %v576, 0
    %v624 = vsel %vm221, %v577, 0
    %626 = vmatprep.subr.mxu0 0.0
    %627 = vmatpush1.msra.mxu0 %v86
    %628 = vmatprep.subr.mxu0 0.0
    %629 = vmatpush1.msra.mxu0 %v87
    %630 = vmatprep.subr.mxu0 0.0
    %631 = vmatpush1.msra.mxu0 %v88
    %632 = vmatprep.subr.mxu0 0.0
    %633 = vmatpush1.msra.mxu0 %v89
    %634 = vmatprep.subr.mxu0 0.0
    %635 = vmatpush1.msra.mxu0 0.0
    %636 = vmatprep.subr.mxu0 0.0
    %637 = vmatpush1.msra.mxu0 0.0
    %638 = vmatprep.subr.mxu0 0.0
    %639 = vmatpush1.msra.mxu0 0.0
    %640 = vmatprep.subr.mxu0 0.0
    %641 = vmatpush1.msra.mxu0 0.0
    %642 = vmatprep.subr.mxu0 0.0
    %643 = vmatpush1.msra.mxu0 0.0
    %644 = vmatprep.subr.mxu0 0.0
    %645 = vmatpush1.msra.mxu0 0.0
    %646 = vmatprep.subr.mxu0 0.0
    %647 = vmatpush1.msra.mxu0 0.0
    %648 = vmatprep.subr.mxu0 0.0
    %649 = vmatpush1.msra.mxu0 0.0
    %650 = vmatprep.subr.mxu0 0.0
    %651 = vmatpush1.msra.mxu0 0.0
    %652 = vmatprep.subr.mxu0 0.0
    %653 = vmatpush1.msra.mxu0 0.0
    %654 = vmatprep.subr.mxu0 0.0
    %655 = vmatpush1.msra.mxu0 0.0
    %656 = vmatprep.subr.mxu0 0.0
    %657 = vmatpush1.msra.mxu0 0.0
    %658 = vmatprep.subr.mxu0 0.0
    %659 = vmatpush1.msra.mxu0 0.0
    %660 = vmatprep.subr.mxu0 0.0
    %661 = vmatpush1.msra.mxu0 0.0
    %662 = vmatprep.subr.mxu0 0.0
    %663 = vmatpush1.msra.mxu0 0.0
    %664 = vmatprep.subr.mxu0 0.0
    %665 = vmatpush1.msra.mxu0 0.0
    %666 = vmatprep.subr.mxu0 0.0
    %667 = vmatpush1.msra.mxu0 0.0
    %668 = vmatprep.subr.mxu0 0.0
    %669 = vmatpush1.msra.mxu0 0.0
    %670 = vmatprep.subr.mxu0 0.0
    %671 = vmatpush1.msra.mxu0 0.0
    %672 = vmatprep.subr.mxu0 0.0
    %673 = vmatpush1.msra.mxu0 0.0
    %674 = vmatprep.subr.mxu0 0.0
    %675 = vmatpush1.msra.mxu0 0.0
    %676 = vmatprep.subr.mxu0 0.0
    %677 = vmatpush1.msra.mxu0 0.0
    %678 = vmatprep.subr.mxu0 0.0
    %679 = vmatpush1.msra.mxu0 0.0
    %680 = vmatprep.subr.mxu0 0.0
    %681 = vmatpush1.msra.mxu0 0.0
    %682 = vmatprep.subr.mxu0 0.0
    %683 = vmatpush1.msra.mxu0 0.0
    %684 = vmatprep.subr.mxu0 0.0
    %685 = vmatpush1.msra.mxu0 0.0
    %686 = vmatprep.subr.mxu0 0.0
    %687 = vmatpush1.msra.mxu0 0.0
    %688 = vmatprep.subr.mxu0 0.0
    %689 = vmatpush1.msra.mxu0 0.0
    %690 = vmatprep.mubr.f32.mxu0 0.0
    %691 = vmatmul.mubr.f32.gmra.mrb[0].mxu0 %v579
    %v692 = vpop.f32.mrb[0].mxu0
    %v693 = vadd.f32 0.0, %v692
    %v694 = vpop.f32.mrb[0].mxu0
    %695 = vmatprep.mubr.f32.mxu0 0.0
    %696 = vmatmul.mubr.f32.gmra.mrb[0].mxu0 %v582
    %v697 = vpop.f32.mrb[0].mxu0
    %v698 = vadd.f32 0.0, %v697
    %v699 = vpop.f32.mrb[0].mxu0
    %700 = vmatprep.mubr.f32.mxu0 0.0
    %701 = vmatmul.mubr.f32.gmra.mrb[0].mxu0 %v585
    %v702 = vpop.f32.mrb[0].mxu0
    %v703 = vadd.f32 0.0, %v702
    %v704 = vpop.f32.mrb[0].mxu0
    %705 = vmatprep.mubr.f32.mxu0 0.0
    %706 = vmatmul.mubr.f32.gmra.mrb[0].mxu0 %v588
    %v707 = vpop.f32.mrb[0].mxu0
    %v708 = vadd.f32 0.0, %v707
    %v709 = vpop.f32.mrb[0].mxu0
    %710 = vmatprep.mubr.f32.mxu0 0.0
    %711 = vmatmul.mubr.f32.gmra.mrb[0].mxu0 %v591
    %v712 = vpop.f32.mrb[0].mxu0
    %v713 = vadd.f32 0.0, %v712
    %v714 = vpop.f32.mrb[0].mxu0
    %715 = vmatprep.mubr.f32.mxu0 0.0
    %716 = vmatmul.mubr.f32.gmra.mrb[0].mxu0 %v594
    %v717 = vpop.f32.mrb[0].mxu0
    %v718 = vadd.f32 0.0, %v717
    %v719 = vpop.f32.mrb[0].mxu0
    %720 = vmatprep.mubr.f32.mxu0 0.0
    %721 = vmatmul.mubr.f32.gmra.mrb[0].mxu0 %v597
    %v722 = vpop.f32.mrb[0].mxu0
    %v723 = vadd.f32 0.0, %v722
    %v724 = vpop.f32.mrb[0].mxu0
    %725 = vmatprep.mubr.f32.mxu0 0.0
    %726 = vmatmul.mubr.f32.gmra.mrb[0].mxu0 %v600
    %v727 = vpop.f32.mrb[0].mxu0
    %v728 = vadd.f32 0.0, %v727
    %v729 = vpop.f32.mrb[0].mxu0
    %730 = vmatprep.mubr.f32.mxu0 0.0
    %731 = vmatmul.mubr.f32.gmra.mrb[0].mxu0 %v603
    %v732 = vpop.f32.mrb[0].mxu0
    %v733 = vadd.f32 0.0, %v732
    %v734 = vpop.f32.mrb[0].mxu0
    %735 = vmatprep.mubr.f32.mxu0 0.0
    %736 = vmatmul.mubr.f32.gmra.mrb[0].mxu0 %v606
    %v737 = vpop.f32.mrb[0].mxu0
    %v738 = vadd.f32 0.0, %v737
    %v739 = vpop.f32.mrb[0].mxu0
    %740 = vmatprep.mubr.f32.mxu0 0.0
    %741 = vmatmul.mubr.f32.gmra.mrb[0].mxu0 %v609
    %v742 = vpop.f32.mrb[0].mxu0
    %v743 = vadd.f32 0.0, %v742
    %v744 = vpop.f32.mrb[0].mxu0
    %745 = vmatprep.mubr.f32.mxu0 0.0
    %746 = vmatmul.mubr.f32.gmra.mrb[0].mxu0 %v612
    %v747 = vpop.f32.mrb[0].mxu0
    %v748 = vadd.f32 0.0, %v747
    %v749 = vpop.f32.mrb[0].mxu0
    %750 = vmatprep.mubr.f32.mxu0 0.0
    %751 = vmatmul.mubr.f32.gmra.mrb[0].mxu0 %v615
    %v752 = vpop.f32.mrb[0].mxu0
    %v753 = vadd.f32 0.0, %v752
    %v754 = vpop.f32.mrb[0].mxu0
    %755 = vmatprep.mubr.f32.mxu0 0.0
    %756 = vmatmul.mubr.f32.gmra.mrb[0].mxu0 %v618
    %v757 = vpop.f32.mrb[0].mxu0
    %v758 = vadd.f32 0.0, %v757
    %v759 = vpop.f32.mrb[0].mxu0
    %760 = vmatprep.mubr.f32.mxu0 0.0
    %761 = vmatmul.mubr.f32.gmra.mrb[0].mxu0 %v621
    %v762 = vpop.f32.mrb[0].mxu0
    %v763 = vadd.f32 0.0, %v762
    %v764 = vpop.f32.mrb[0].mxu0
    %765 = vmatprep.mubr.f32.mxu0 0.0
    %766 = vmatmul.mubr.f32.gmra.mrb[0].mxu0 %v624
    %v767 = vpop.f32.mrb[0].mxu0
    %v768 = vadd.f32 0.0, %v767
    %v769 = vpop.f32.mrb[0].mxu0
    %770 = vdwg.mxu0
    %v771 = vmul.f32 %v260, %v524
    %v773 = vsel %vm221, %v771, 0
    %775 = vmatprep.subr.mxu0 0.0
    %776 = vmatpush1.msra.mxu0 %v86
    %777 = vmatprep.subr.mxu0 0.0
    %778 = vmatpush1.msra.mxu0 %v87
    %779 = vmatprep.subr.mxu0 0.0
    %780 = vmatpush1.msra.mxu0 %v88
    %781 = vmatprep.subr.mxu0 0.0
    %782 = vmatpush1.msra.mxu0 %v89
    %783 = vmatprep.subr.mxu0 0.0
    %784 = vmatpush1.msra.mxu0 0.0
    %785 = vmatprep.subr.mxu0 0.0
    %786 = vmatpush1.msra.mxu0 0.0
    %787 = vmatprep.subr.mxu0 0.0
    %788 = vmatpush1.msra.mxu0 0.0
    %789 = vmatprep.subr.mxu0 0.0
    %790 = vmatpush1.msra.mxu0 0.0
    %791 = vmatprep.subr.mxu0 0.0
    %792 = vmatpush1.msra.mxu0 0.0
    %793 = vmatprep.subr.mxu0 0.0
    %794 = vmatpush1.msra.mxu0 0.0
    %795 = vmatprep.subr.mxu0 0.0
    %796 = vmatpush1.msra.mxu0 0.0
    %797 = vmatprep.subr.mxu0 0.0
    %798 = vmatpush1.msra.mxu0 0.0
    %799 = vmatprep.subr.mxu0 0.0
    %800 = vmatpush1.msra.mxu0 0.0
    %801 = vmatprep.subr.mxu0 0.0
    %802 = vmatpush1.msra.mxu0 0.0
    %803 = vmatprep.subr.mxu0 0.0
    %804 = vmatpush1.msra.mxu0 0.0
    %805 = vmatprep.subr.mxu0 0.0
    %806 = vmatpush1.msra.mxu0 0.0
    %807 = vmatprep.subr.mxu0 0.0
    %808 = vmatpush1.msra.mxu0 0.0
    %809 = vmatprep.subr.mxu0 0.0
    %810 = vmatpush1.msra.mxu0 0.0
    %811 = vmatprep.subr.mxu0 0.0
    %812 = vmatpush1.msra.mxu0 0.0
    %813 = vmatprep.subr.mxu0 0.0
    %814 = vmatpush1.msra.mxu0 0.0
    %815 = vmatprep.subr.mxu0 0.0
    %816 = vmatpush1.msra.mxu0 0.0
    %817 = vmatprep.subr.mxu0 0.0
    %818 = vmatpush1.msra.mxu0 0.0
    %819 = vmatprep.subr.mxu0 0.0
    %820 = vmatpush1.msra.mxu0 0.0
    %821 = vmatprep.subr.mxu0 0.0
    %822 = vmatpush1.msra.mxu0 0.0
    %823 = vmatprep.subr.mxu0 0.0
    %824 = vmatpush1.msra.mxu0 0.0
    %825 = vmatprep.subr.mxu0 0.0
    %826 = vmatpush1.msra.mxu0 0.0
    %827 = vmatprep.subr.mxu0 0.0
    %828 = vmatpush1.msra.mxu0 0.0
    %829 = vmatprep.subr.mxu0 0.0
    %830 = vmatpush1.msra.mxu0 0.0
    %831 = vmatprep.subr.mxu0 0.0
    %832 = vmatpush1.msra.mxu0 0.0
    %833 = vmatprep.subr.mxu0 0.0
    %834 = vmatpush1.msra.mxu0 0.0
    %835 = vmatprep.subr.mxu0 0.0
    %836 = vmatpush1.msra.mxu0 0.0
    %837 = vmatprep.subr.mxu0 0.0
    %838 = vmatpush1.msra.mxu0 0.0
    %839 = vmatprep.mubr.f32.mxu0 0.0
    %840 = vmatmul.mubr.f32.gmra.mrb[0].mxu0 %v773
    %v841 = vpop.f32.mrb[0].mxu0
    %v842 = vadd.f32 0.0, %v841
    %v843 = vpop.f32.mrb[0].mxu0
    %844 = vdwg.mxu0
    %vm845 = vcmask 31744
    %v846 = vsel %vm845, %v693, -inf
    %v847 = vsel %vm845, %v698, -inf
    %v848 = vsel %vm845, %v703, -inf
    %v849 = vmax.f32 %v846, %v848
    %v850 = vsel %vm845, %v708, -inf
    %v851 = vmax.f32 %v847, %v850
    %v852 = vsel %vm845, %v713, -inf
    %v853 = vmax.f32 %v849, %v852
    %v854 = vsel %vm845, %v718, -inf
    %v855 = vmax.f32 %v851, %v854
    %v856 = vsel %vm845, %v723, -inf
    %v857 = vmax.f32 %v853, %v856
    %v858 = vsel %vm845, %v728, -inf
    %v859 = vmax.f32 %v855, %v858
    %v860 = vmax.f32 %v857, %v859
    %v861 = vrot.slane %v860, 4
    %v862 = vmax.f32 %v860, %v861
    %v863 = vrot.slane %v862, 2
    %v864 = vmax.f32 %v862, %v863
    %v865 = vrot.slane %v864, 1
    %v866 = vmax.f32 %v864, %v865
    %v867 = vsel %vm845, %v733, -inf
    %v868 = vsel %vm845, %v738, -inf
    %v869 = vsel %vm845, %v743, -inf
    %v870 = vmax.f32 %v867, %v869
    %v871 = vsel %vm845, %v748, -inf
    %v872 = vmax.f32 %v868, %v871
    %v873 = vsel %vm845, %v753, -inf
    %v874 = vmax.f32 %v870, %v873
    %v875 = vsel %vm845, %v758, -inf
    %v876 = vmax.f32 %v872, %v875
    %v877 = vsel %vm845, %v763, -inf
    %v878 = vmax.f32 %v874, %v877
    %v879 = vsel %vm845, %v768, -inf
    %v880 = vmax.f32 %v876, %v879
    %v881 = vmax.f32 %v878, %v880
    %v882 = vrot.slane %v881, 4
    %v883 = vmax.f32 %v881, %v882
    %v884 = vrot.slane %v883, 2
    %v885 = vmax.f32 %v883, %v884
    %v886 = vrot.slane %v885, 1
    %v887 = vmax.f32 %v885, %v886
    %v889 = vrot.slane %v842, 1
    %v892 = vmax.f32 %v866, %v842
    %v893 = vmax.f32 %v887, %v889
    %v894 = vlaneseq
    %v895 = vshrl.u32 %v894, 7
    %v896 = vsub.s32 0, %v895
    %v897 = vrot.slane %v892, %v896
    %v898 = vlaneseq
    %v899 = vshrl.u32 %v898, 7
    %v900 = vsub.s32 0, %v899
    %v901 = vrot.slane %v893, %v900
    %v902 = vsub.f32 %v693, %v897
    %v903 = vsub.f32 %v698, %v897
    %v904 = vsub.f32 %v703, %v897
    %v905 = vsub.f32 %v708, %v897
    %v906 = vsub.f32 %v713, %v897
    %v907 = vsub.f32 %v718, %v897
    %v908 = vsub.f32 %v723, %v897
    %v909 = vsub.f32 %v728, %v897
    %v910 = vsub.f32 %v733, %v901
    %v911 = vsub.f32 %v738, %v901
    %v912 = vsub.f32 %v743, %v901
    %v913 = vsub.f32 %v748, %v901
    %v914 = vsub.f32 %v753, %v901
    %v915 = vsub.f32 %v758, %v901
    %v916 = vsub.f32 %v763, %v901
    %v917 = vsub.f32 %v768, %v901
    %v918 = vmul.f32 %v902, 1.442695
    %v919 = vpow.pop %v918
    %v920 = vmul.f32 %v903, 1.442695
    %v921 = vpow.pop %v920
    %v922 = vmul.f32 %v904, 1.442695
    %v923 = vpow.pop %v922
    %v924 = vmul.f32 %v905, 1.442695
    %v925 = vpow.pop %v924
    %v926 = vmul.f32 %v906, 1.442695
    %v927 = vpow.pop %v926
    %v928 = vmul.f32 %v907, 1.442695
    %v929 = vpow.pop %v928
    %v930 = vmul.f32 %v908, 1.442695
    %v931 = vpow.pop %v930
    %v932 = vmul.f32 %v909, 1.442695
    %v933 = vpow.pop %v932
    %v934 = vmul.f32 %v910, 1.442695
    %v935 = vpow.pop %v934
    %v936 = vmul.f32 %v911, 1.442695
    %v937 = vpow.pop %v936
    %v938 = vmul.f32 %v912, 1.442695
    %v939 = vpow.pop %v938
    %v940 = vmul.f32 %v913, 1.442695
    %v941 = vpow.pop %v940
    %v942 = vmul.f32 %v914, 1.442695
    %v943 = vpow.pop %v942
    %v944 = vmul.f32 %v915, 1.442695
    %v945 = vpow.pop %v944
    %v946 = vmul.f32 %v916, 1.442695
    %v947 = vpow.pop %v946
    %v948 = vmul.f32 %v917, 1.442695
    %v949 = vpow.pop %v948
    %v952 = vrot.slane %v893, 7
    %v953 = vsel %vm206, %v952, %v892
    %v955 = vsub.f32 %v842, %v953
    %v956 = vmul.f32 %v955, 1.442695
    %v957 = vpow.pop %v956
    %v958 = vsel %vm845, %v919, 0.0
    %v959 = vsel %vm845, %v921, 0.0
    %v960 = vadd.f32 %v958, %v959
    %v961 = vsel %vm845, %v923, 0.0
    %v962 = vadd.f32 %v960, %v961
    %v963 = vsel %vm845, %v925, 0.0
    %v964 = vadd.f32 %v962, %v963
    %v965 = vsel %vm845, %v927, 0.0
    %v966 = vadd.f32 %v964, %v965
    %v967 = vsel %vm845, %v929, 0.0
    %v968 = vadd.f32 %v966, %v967
    %v969 = vsel %vm845, %v931, 0.0
    %v970 = vadd.f32 %v968, %v969
    %v971 = vsel %vm845, %v933, 0.0
    %v972 = vadd.f32 %v970, %v971
    %v973 = vrot.slane %v972, 4
    %v974 = vadd.f32 %v972, %v973
    %v975 = vrot.slane %v974, 2
    %v976 = vadd.f32 %v974, %v975
    %v977 = vrot.slane %v976, 1
    %v978 = vadd.f32 %v976, %v977
    %v979 = vsel %vm845, %v935, 0.0
    %v980 = vsel %vm845, %v937, 0.0
    %v981 = vadd.f32 %v979, %v980
    %v982 = vsel %vm845, %v939, 0.0
    %v983 = vadd.f32 %v981, %v982
    %v984 = vsel %vm845, %v941, 0.0
    %v985 = vadd.f32 %v983, %v984
    %v986 = vsel %vm845, %v943, 0.0
    %v987 = vadd.f32 %v985, %v986
    %v988 = vsel %vm845, %v945, 0.0
    %v989 = vadd.f32 %v987, %v988
    %v990 = vsel %vm845, %v947, 0.0
    %v991 = vadd.f32 %v989, %v990
    %v992 = vsel %vm845, %v949, 0.0
    %v993 = vadd.f32 %v991, %v992
    %v994 = vrot.slane %v993, 4
    %v995 = vadd.f32 %v993, %v994
    %v996 = vrot.slane %v995, 2
    %v997 = vadd.f32 %v995, %v996
    %v998 = vrot.slane %v997, 1
    %v999 = vadd.f32 %v997, %v998
    %v1001 = vrot.slane %v957, 1
    %v1004 = vadd.f32 %v978, %v957
    %v1005 = vadd.f32 %v999, %v1001
    %v1006 = vrcp.pop %v1004
    %v1007 = vrcp.pop %v1005
    %v1008 = vlaneseq
    %v1009 = vshrl.u32 %v1008, 7
    %v1010 = vsub.s32 0, %v1009
    %v1011 = vrot.slane %v1006, %v1010
    %v1012 = vlaneseq
    %v1013 = vshrl.u32 %v1012, 7
    %v1014 = vsub.s32 0, %v1013
    %v1015 = vrot.slane %v1007, %v1014
    %v1016 = vmul.f32 %v919, %v1011
    %v1017 = vmul.f32 %v921, %v1011
    %v1018 = vmul.f32 %v923, %v1011
    %v1019 = vmul.f32 %v925, %v1011
    %v1020 = vmul.f32 %v927, %v1011
    %v1021 = vmul.f32 %v929, %v1011
    %v1022 = vmul.f32 %v931, %v1011
    %v1023 = vmul.f32 %v933, %v1011
    %v1024 = vmul.f32 %v935, %v1015
    %v1025 = vmul.f32 %v937, %v1015
    %v1026 = vmul.f32 %v939, %v1015
    %v1027 = vmul.f32 %v941, %v1015
    %v1028 = vmul.f32 %v943, %v1015
    %v1029 = vmul.f32 %v945, %v1015
    %v1030 = vmul.f32 %v947, %v1015
    %v1031 = vmul.f32 %v949, %v1015
    %v1034 = vrot.slane %v1007, 7
    %v1035 = vsel %vm206, %v1034, %v1006
    %v1037 = vmul.f32 %v957, %v1035
    %v1039 = vsel %vm845, %v1016, 0
    %v1042 = vsel %vm845, %v1017, 0
    %v1045 = vsel %vm845, %v1018, 0
    %v1048 = vsel %vm845, %v1019, 0
    %v1051 = vsel %vm845, %v1020, 0
    %v1054 = vsel %vm845, %v1021, 0
    %v1057 = vsel %vm845, %v1022, 0
    %v1060 = vsel %vm845, %v1023, 0
    %v1063 = vsel %vm845, %v1024, 0
    %v1066 = vsel %vm845, %v1025, 0
    %v1069 = vsel %vm845, %v1026, 0
    %v1072 = vsel %vm845, %v1027, 0
    %v1075 = vsel %vm845, %v1028, 0
    %v1078 = vsel %vm845, %v1029, 0
    %v1081 = vsel %vm845, %v1030, 0
    %v1084 = vsel %vm845, %v1031, 0
    %vm1086 = vcmask 1043456
    %v1088 = vsel %vm1086, %v90, 0
    %1090 = vmatprep.subr.mxu0 0.0
    %1091 = vmatpush1.msra.mxu0 %v1088
    %1092 = vmatprep.subr.mxu0 0.0
    %1093 = vmatpush1.msra.mxu0 0.0
    %1094 = vmatprep.subr.mxu0 0.0
    %1095 = vmatpush1.msra.mxu0 0.0
    %1096 = vmatprep.subr.mxu0 0.0
    %1097 = vmatpush1.msra.mxu0 0.0
    %1098 = vmatprep.subr.mxu0 0.0
    %1099 = vmatpush1.msra.mxu0 0.0
    %1100 = vmatprep.subr.mxu0 0.0
    %1101 = vmatpush1.msra.mxu0 0.0
    %1102 = vmatprep.subr.mxu0 0.0
    %1103 = vmatpush1.msra.mxu0 0.0
    %1104 = vmatprep.subr.mxu0 0.0
    %1105 = vmatpush1.msra.mxu0 0.0
    %1106 = vmatprep.subr.mxu0 0.0
    %1107 = vmatpush1.msra.mxu0 0.0
    %1108 = vmatprep.subr.mxu0 0.0
    %1109 = vmatpush1.msra.mxu0 0.0
    %1110 = vmatprep.subr.mxu0 0.0
    %1111 = vmatpush1.msra.mxu0 0.0
    %1112 = vmatprep.subr.mxu0 0.0
    %1113 = vmatpush1.msra.mxu0 0.0
    %1114 = vmatprep.subr.mxu0 0.0
    %1115 = vmatpush1.msra.mxu0 0.0
    %1116 = vmatprep.subr.mxu0 0.0
    %1117 = vmatpush1.msra.mxu0 0.0
    %1118 = vmatprep.subr.mxu0 0.0
    %1119 = vmatpush1.msra.mxu0 0.0
    %1120 = vmatprep.subr.mxu0 0.0
    %1121 = vmatpush1.msra.mxu0 0.0
    %1122 = vmatprep.subr.mxu0 0.0
    %1123 = vmatpush1.msra.mxu0 0.0
    %1124 = vmatprep.subr.mxu0 0.0
    %1125 = vmatpush1.msra.mxu0 0.0
    %1126 = vmatprep.subr.mxu0 0.0
    %1127 = vmatpush1.msra.mxu0 0.0
    %1128 = vmatprep.subr.mxu0 0.0
    %1129 = vmatpush1.msra.mxu0 0.0
    %1130 = vmatprep.subr.mxu0 0.0
    %1131 = vmatpush1.msra.mxu0 0.0
    %1132 = vmatprep.subr.mxu0 0.0
    %1133 = vmatpush1.msra.mxu0 0.0
    %1134 = vmatprep.subr.mxu0 0.0
    %1135 = vmatpush1.msra.mxu0 0.0
    %1136 = vmatprep.subr.mxu0 0.0
    %1137 = vmatpush1.msra.mxu0 0.0
    %1138 = vmatprep.subr.mxu0 0.0
    %1139 = vmatpush1.msra.mxu0 0.0
    %1140 = vmatprep.subr.mxu0 0.0
    %1141 = vmatpush1.msra.mxu0 0.0
    %1142 = vmatprep.subr.mxu0 0.0
    %1143 = vmatpush1.msra.mxu0 0.0
    %1144 = vmatprep.subr.mxu0 0.0
    %1145 = vmatpush1.msra.mxu0 0.0
    %1146 = vmatprep.subr.mxu0 0.0
    %1147 = vmatpush1.msra.mxu0 0.0
    %1148 = vmatprep.subr.mxu0 0.0
    %1149 = vmatpush1.msra.mxu0 0.0
    %1150 = vmatprep.subr.mxu0 0.0
    %1151 = vmatpush1.msra.mxu0 0.0
    %1152 = vmatprep.subr.mxu0 0.0
    %1153 = vmatpush1.msra.mxu0 0.0
    %1154 = vmatprep.mubr.f32.mxu0 0.0
    %1155 = vmatmul.mubr.f32.gmra.mrb[0].mxu0 %v1039
    %v1156 = vpop.f32.mrb[0].mxu0
    %v1157 = vadd.f32 0.0, %v1156
    %v1158 = vpop.f32.mrb[0].mxu0
    %1159 = vmatprep.mubr.f32.mxu0 0.0
    %1160 = vmatmul.mubr.f32.gmra.mrb[0].mxu0 %v1042
    %v1161 = vpop.f32.mrb[0].mxu0
    %v1162 = vadd.f32 0.0, %v1161
    %v1163 = vpop.f32.mrb[0].mxu0
    %1164 = vmatprep.mubr.f32.mxu0 0.0
    %1165 = vmatmul.mubr.f32.gmra.mrb[0].mxu0 %v1045
    %v1166 = vpop.f32.mrb[0].mxu0
    %v1167 = vadd.f32 0.0, %v1166
    %v1168 = vpop.f32.mrb[0].mxu0
    %1169 = vmatprep.mubr.f32.mxu0 0.0
    %1170 = vmatmul.mubr.f32.gmra.mrb[0].mxu0 %v1048
    %v1171 = vpop.f32.mrb[0].mxu0
    %v1172 = vadd.f32 0.0, %v1171
    %v1173 = vpop.f32.mrb[0].mxu0
    %1174 = vmatprep.mubr.f32.mxu0 0.0
    %1175 = vmatmul.mubr.f32.gmra.mrb[0].mxu0 %v1051
    %v1176 = vpop.f32.mrb[0].mxu0
    %v1177 = vadd.f32 0.0, %v1176
    %v1178 = vpop.f32.mrb[0].mxu0
    %1179 = vmatprep.mubr.f32.mxu0 0.0
    %1180 = vmatmul.mubr.f32.gmra.mrb[0].mxu0 %v1054
    %v1181 = vpop.f32.mrb[0].mxu0
    %v1182 = vadd.f32 0.0, %v1181
    %v1183 = vpop.f32.mrb[0].mxu0
    %1184 = vmatprep.mubr.f32.mxu0 0.0
    %1185 = vmatmul.mubr.f32.gmra.mrb[0].mxu0 %v1057
    %v1186 = vpop.f32.mrb[0].mxu0
    %v1187 = vadd.f32 0.0, %v1186
    %v1188 = vpop.f32.mrb[0].mxu0
    %1189 = vmatprep.mubr.f32.mxu0 0.0
    %1190 = vmatmul.mubr.f32.gmra.mrb[0].mxu0 %v1060
    %v1191 = vpop.f32.mrb[0].mxu0
    %v1192 = vadd.f32 0.0, %v1191
    %v1193 = vpop.f32.mrb[0].mxu0
    %1194 = vmatprep.mubr.f32.mxu0 0.0
    %1195 = vmatmul.mubr.f32.gmra.mrb[0].mxu0 %v1063
    %v1196 = vpop.f32.mrb[0].mxu0
    %v1197 = vadd.f32 0.0, %v1196
    %v1198 = vpop.f32.mrb[0].mxu0
    %1199 = vmatprep.mubr.f32.mxu0 0.0
    %1200 = vmatmul.mubr.f32.gmra.mrb[0].mxu0 %v1066
    %v1201 = vpop.f32.mrb[0].mxu0
    %v1202 = vadd.f32 0.0, %v1201
    %v1203 = vpop.f32.mrb[0].mxu0
    %1204 = vmatprep.mubr.f32.mxu0 0.0
    %1205 = vmatmul.mubr.f32.gmra.mrb[0].mxu0 %v1069
    %v1206 = vpop.f32.mrb[0].mxu0
    %v1207 = vadd.f32 0.0, %v1206
    %v1208 = vpop.f32.mrb[0].mxu0
    %1209 = vmatprep.mubr.f32.mxu0 0.0
    %1210 = vmatmul.mubr.f32.gmra.mrb[0].mxu0 %v1072
    %v1211 = vpop.f32.mrb[0].mxu0
    %v1212 = vadd.f32 0.0, %v1211
    %v1213 = vpop.f32.mrb[0].mxu0
    %1214 = vmatprep.mubr.f32.mxu0 0.0
    %1215 = vmatmul.mubr.f32.gmra.mrb[0].mxu0 %v1075
    %v1216 = vpop.f32.mrb[0].mxu0
    %v1217 = vadd.f32 0.0, %v1216
    %v1218 = vpop.f32.mrb[0].mxu0
    %1219 = vmatprep.mubr.f32.mxu0 0.0
    %1220 = vmatmul.mubr.f32.gmra.mrb[0].mxu0 %v1078
    %v1221 = vpop.f32.mrb[0].mxu0
    %v1222 = vadd.f32 0.0, %v1221
    %v1223 = vpop.f32.mrb[0].mxu0
    %1224 = vmatprep.mubr.f32.mxu0 0.0
    %1225 = vmatmul.mubr.f32.gmra.mrb[0].mxu0 %v1081
    %v1226 = vpop.f32.mrb[0].mxu0
    %v1227 = vadd.f32 0.0, %v1226
    %v1228 = vpop.f32.mrb[0].mxu0
    %1229 = vmatprep.mubr.f32.mxu0 0.0
    %1230 = vmatmul.mubr.f32.gmra.mrb[0].mxu0 %v1084
    %v1231 = vpop.f32.mrb[0].mxu0
    %v1232 = vadd.f32 0.0, %v1231
    %v1233 = vpop.f32.mrb[0].mxu0
    %1234 = vdwg.mxu0
    %1251 = vrot.lane.b32.xlu0 %v466, 96
    %v1252 = vpop.permute.xlu0 %1251
    %1253 = vrot.lane.b32.xlu0 %v467, 96
    %v1254 = vpop.permute.xlu0 %1253
    %1255 = vrot.lane.b32.xlu0 %v468, 96
    %v1256 = vpop.permute.xlu0 %1255
    %1257 = vrot.lane.b32.xlu0 %v469, 96
    %v1258 = vpop.permute.xlu0 %1257
    %1259 = vrot.lane.b32.xlu0 %v470, 96
    %v1260 = vpop.permute.xlu0 %1259
    %1261 = vrot.lane.b32.xlu0 %v471, 96
    %v1262 = vpop.permute.xlu0 %1261
    %1263 = vrot.lane.b32.xlu0 %v472, 96
    %v1264 = vpop.permute.xlu0 %1263
    %1265 = vrot.lane.b32.xlu0 %v473, 96
    %v1266 = vpop.permute.xlu0 %1265
    %1267 = vrot.lane.b32.xlu0 %v474, 96
    %v1268 = vpop.permute.xlu0 %1267
    %1269 = vrot.lane.b32.xlu0 %v475, 96
    %v1270 = vpop.permute.xlu0 %1269
    %1271 = vrot.lane.b32.xlu0 %v476, 96
    %v1272 = vpop.permute.xlu0 %1271
    %1273 = vrot.lane.b32.xlu0 %v477, 96
    %v1274 = vpop.permute.xlu0 %1273
    %1275 = vrot.lane.b32.xlu0 %v478, 96
    %v1276 = vpop.permute.xlu0 %1275
    %1277 = vrot.lane.b32.xlu0 %v479, 96
    %v1278 = vpop.permute.xlu0 %1277
    %1279 = vrot.lane.b32.xlu0 %v480, 96
    %v1280 = vpop.permute.xlu0 %1279
    %1281 = vrot.lane.b32.xlu0 %v481, 96
    %v1282 = vpop.permute.xlu0 %1281
    %v1299 = vmul.f32 %v1157, %v1252
    %v1300 = vmul.f32 %v1162, %v1254
    %v1301 = vmul.f32 %v1167, %v1256
    %v1302 = vmul.f32 %v1172, %v1258
    %v1303 = vmul.f32 %v1177, %v1260
    %v1304 = vmul.f32 %v1182, %v1262
    %v1305 = vmul.f32 %v1187, %v1264
    %v1306 = vmul.f32 %v1192, %v1266
    %v1307 = vmul.f32 %v1197, %v1268
    %v1308 = vmul.f32 %v1202, %v1270
    %v1309 = vmul.f32 %v1207, %v1272
    %v1310 = vmul.f32 %v1212, %v1274
    %v1311 = vmul.f32 %v1217, %v1276
    %v1312 = vmul.f32 %v1222, %v1278
    %v1313 = vmul.f32 %v1227, %v1280
    %v1314 = vmul.f32 %v1232, %v1282
    %v1315 = vsel %vm221, %v1299, 0.0
    %v1316 = vsel %vm221, %v1300, 0.0
    %v1317 = vadd.f32 %v1315, %v1316
    %v1318 = vsel %vm221, %v1301, 0.0
    %v1319 = vadd.f32 %v1317, %v1318
    %v1320 = vsel %vm221, %v1302, 0.0
    %v1321 = vadd.f32 %v1319, %v1320
    %v1322 = vsel %vm221, %v1303, 0.0
    %v1323 = vadd.f32 %v1321, %v1322
    %v1324 = vsel %vm221, %v1304, 0.0
    %v1325 = vadd.f32 %v1323, %v1324
    %v1326 = vsel %vm221, %v1305, 0.0
    %v1327 = vadd.f32 %v1325, %v1326
    %v1328 = vsel %vm221, %v1306, 0.0
    %v1329 = vadd.f32 %v1327, %v1328
    %v1330 = vrot.slane %v1329, 4
    %v1331 = vadd.f32 %v1329, %v1330
    %v1332 = vrot.slane %v1331, 2
    %v1333 = vadd.f32 %v1331, %v1332
    %v1334 = vrot.slane %v1333, 1
    %v1335 = vadd.f32 %v1333, %v1334
    %v1336 = vsel %vm221, %v1307, 0.0
    %v1337 = vsel %vm221, %v1308, 0.0
    %v1338 = vadd.f32 %v1336, %v1337
    %v1339 = vsel %vm221, %v1309, 0.0
    %v1340 = vadd.f32 %v1338, %v1339
    %v1341 = vsel %vm221, %v1310, 0.0
    %v1342 = vadd.f32 %v1340, %v1341
    %v1343 = vsel %vm221, %v1311, 0.0
    %v1344 = vadd.f32 %v1342, %v1343
    %v1345 = vsel %vm221, %v1312, 0.0
    %v1346 = vadd.f32 %v1344, %v1345
    %v1347 = vsel %vm221, %v1313, 0.0
    %v1348 = vadd.f32 %v1346, %v1347
    %v1349 = vsel %vm221, %v1314, 0.0
    %v1350 = vadd.f32 %v1348, %v1349
    %v1351 = vrot.slane %v1350, 4
    %v1352 = vadd.f32 %v1350, %v1351
    %v1353 = vrot.slane %v1352, 2
    %v1354 = vadd.f32 %v1352, %v1353
    %v1355 = vrot.slane %v1354, 1
    %v1356 = vadd.f32 %v1354, %v1355
    %v1358 = vsel %vm845, %v1037, 0
    %1360 = vmatprep.subr.mxu0 0.0
    %1361 = vmatpush1.msra.mxu0 %v1088
    %1362 = vmatprep.subr.mxu0 0.0
    %1363 = vmatpush1.msra.mxu0 0.0
    %1364 = vmatprep.subr.mxu0 0.0
    %1365 = vmatpush1.msra.mxu0 0.0
    %1366 = vmatprep.subr.mxu0 0.0
    %1367 = vmatpush1.msra.mxu0 0.0
    %1368 = vmatprep.subr.mxu0 0.0
    %1369 = vmatpush1.msra.mxu0 0.0
    %1370 = vmatprep.subr.mxu0 0.0
    %1371 = vmatpush1.msra.mxu0 0.0
    %1372 = vmatprep.subr.mxu0 0.0
    %1373 = vmatpush1.msra.mxu0 0.0
    %1374 = vmatprep.subr.mxu0 0.0
    %1375 = vmatpush1.msra.mxu0 0.0
    %1376 = vmatprep.subr.mxu0 0.0
    %1377 = vmatpush1.msra.mxu0 0.0
    %1378 = vmatprep.subr.mxu0 0.0
    %1379 = vmatpush1.msra.mxu0 0.0
    %1380 = vmatprep.subr.mxu0 0.0
    %1381 = vmatpush1.msra.mxu0 0.0
    %1382 = vmatprep.subr.mxu0 0.0
    %1383 = vmatpush1.msra.mxu0 0.0
    %1384 = vmatprep.subr.mxu0 0.0
    %1385 = vmatpush1.msra.mxu0 0.0
    %1386 = vmatprep.subr.mxu0 0.0
    %1387 = vmatpush1.msra.mxu0 0.0
    %1388 = vmatprep.subr.mxu0 0.0
    %1389 = vmatpush1.msra.mxu0 0.0
    %1390 = vmatprep.subr.mxu0 0.0
    %1391 = vmatpush1.msra.mxu0 0.0
    %1392 = vmatprep.subr.mxu0 0.0
    %1393 = vmatpush1.msra.mxu0 0.0
    %1394 = vmatprep.subr.mxu0 0.0
    %1395 = vmatpush1.msra.mxu0 0.0
    %1396 = vmatprep.subr.mxu0 0.0
    %1397 = vmatpush1.msra.mxu0 0.0
    %1398 = vmatprep.subr.mxu0 0.0
    %1399 = vmatpush1.msra.mxu0 0.0
    %1400 = vmatprep.subr.mxu0 0.0
    %1401 = vmatpush1.msra.mxu0 0.0
    %1402 = vmatprep.subr.mxu0 0.0
    %1403 = vmatpush1.msra.mxu0 0.0
    %1404 = vmatprep.subr.mxu0 0.0
    %1405 = vmatpush1.msra.mxu0 0.0
    %1406 = vmatprep.subr.mxu0 0.0
    %1407 = vmatpush1.msra.mxu0 0.0
    %1408 = vmatprep.subr.mxu0 0.0
    %1409 = vmatpush1.msra.mxu0 0.0
    %1410 = vmatprep.subr.mxu0 0.0
    %1411 = vmatpush1.msra.mxu0 0.0
    %1412 = vmatprep.subr.mxu0 0.0
    %1413 = vmatpush1.msra.mxu0 0.0
    %1414 = vmatprep.subr.mxu0 0.0
    %1415 = vmatpush1.msra.mxu0 0.0
    %1416 = vmatprep.subr.mxu0 0.0
    %1417 = vmatpush1.msra.mxu0 0.0
    %1418 = vmatprep.subr.mxu0 0.0
    %1419 = vmatpush1.msra.mxu0 0.0
    %1420 = vmatprep.subr.mxu0 0.0
    %1421 = vmatpush1.msra.mxu0 0.0
    %1422 = vmatprep.subr.mxu0 0.0
    %1423 = vmatpush1.msra.mxu0 0.0
    %1424 = vmatprep.mubr.f32.mxu0 0.0
    %1425 = vmatmul.mubr.f32.gmra.mrb[0].mxu0 %v1358
    %v1426 = vpop.f32.mrb[0].mxu0
    %v1427 = vadd.f32 0.0, %v1426
    %v1428 = vpop.f32.mrb[0].mxu0
    %1429 = vdwg.mxu0
    %1431 = vrot.lane.b32.xlu0 %v524, 96
    %v1432 = vpop.permute.xlu0 %1431
    %v1434 = vmul.f32 %v1427, %v1432
    %v1436 = vrot.slane %v1434, 1
    %v1439 = vadd.f32 %v1335, %v1434
    %v1440 = vadd.f32 %v1356, %v1436
    %v1441 = vpack.c.bf16 %v1439, %v1439
    %v1442 = vpack.c.bf16 %v1440, %v1440
    %v1443 = vld [vmem:[%s6] sm:$0xf]
    %v1444 = vld [vmem:[%s6 + $0x4] sm:$0xf]
    %v1445 = vld [vmem:[%s6 + $0x8] sm:$0xf]
    %v1446 = vld [vmem:[%s6 + $0xc] sm:$0xf]
    %v1447 = vld [vmem:[%s7] sm:$0x1]
    %v1449 = vlaneseq
    %v1450 = vshrl.u32 %v1449, 7
    %v1451 = vsub.s32 0, %v1450
    %v1452 = vrot.slane %v1447, %v1451
    %v1456 = vunpack.c.l.b16 %v1441
    %v1457 = vunpack.c.l.b16 %v1442
    %v1458 = vrot.slane %v1457, 7
    %v1459 = vsel %vm206, %v1458, %v1456
    %v1460 = vpack.c.b16 %v1459, %v1459
    %v1465 = vunpack.c.l.b16 %v1443
    %v1466 = vunpack.c.l.b16 %v1444
    %v1467 = vunpack.c.l.b16 %v1445
    %v1468 = vunpack.c.l.b16 %v1446
    %v1469 = vpack.c.b16 %v1466, %v1465
    %v1470 = vpack.c.b16 %v1468, %v1467
    %v1474 = vsel %vm221, %v1460, 0
    %1476 = vmatprep.subr.bf16.mxu0 0
    %1477 = vmatpush1.bf16.msra.mxu0 %v1469
    %1478 = vmatprep.subr.bf16.mxu0 0
    %1479 = vmatpush1.bf16.msra.mxu0 %v1470
    %1480 = vmatprep.subr.bf16.mxu0 0
    %1481 = vmatpush1.bf16.msra.mxu0 0
    %1482 = vmatprep.subr.bf16.mxu0 0
    %1483 = vmatpush1.bf16.msra.mxu0 0
    %1484 = vmatprep.subr.bf16.mxu0 0
    %1485 = vmatpush1.bf16.msra.mxu0 0
    %1486 = vmatprep.subr.bf16.mxu0 0
    %1487 = vmatpush1.bf16.msra.mxu0 0
    %1488 = vmatprep.subr.bf16.mxu0 0
    %1489 = vmatpush1.bf16.msra.mxu0 0
    %1490 = vmatprep.subr.bf16.mxu0 0
    %1491 = vmatpush1.bf16.msra.mxu0 0
    %1492 = vmatprep.subr.bf16.mxu0 0
    %1493 = vmatpush1.bf16.msra.mxu0 0
    %1494 = vmatprep.subr.bf16.mxu0 0
    %1495 = vmatpush1.bf16.msra.mxu0 0
    %1496 = vmatprep.subr.bf16.mxu0 0
    %1497 = vmatpush1.bf16.msra.mxu0 0
    %1498 = vmatprep.subr.bf16.mxu0 0
    %1499 = vmatpush1.bf16.msra.mxu0 0
    %1500 = vmatprep.subr.bf16.mxu0 0
    %1501 = vmatpush1.bf16.msra.mxu0 0
    %1502 = vmatprep.subr.bf16.mxu0 0
    %1503 = vmatpush1.bf16.msra.mxu0 0
    %1504 = vmatprep.subr.bf16.mxu0 0
    %1505 = vmatpush1.bf16.msra.mxu0 0
    %1506 = vmatprep.subr.bf16.mxu0 0
    %1507 = vmatpush1.bf16.msra.mxu0 0
    %1508 = vmatprep.mubr.bf16.mxu0 0
    %1509 = vmatmul.mubr.bf16.gmra.mrb[0].mxu0 %v1474
    %v1510 = vpop.f32.mrb[0].mxu0
    %v1511 = vadd.f32 %v1452, %v1510
    %v1512 = vpop.f32.mrb[0].mxu0
    %v1513 = vpop.f32.mrb[0].mxu0
    %v1514 = vpop.f32.mrb[0].mxu0
    %1515 = vdwg.mxu0
    %1516 = vst [vmem:[#allocation8] sm:$0x3] %v1511
    // Predicated region
    $region54: #{tpu_custom_call.1} parent=1 // pred_check
      _
    $region55: #{tpu_custom_call.1} parent=1 // pred_check_branch
      %1518 = sbr.rel (0) target = $region57
    $region56: #{tpu_custom_call.1} parent=1 // pred_region
      %s1520 = ssub.s32 32, 32
      %1521 = vsyncadd [#allocation4], %s1520
      %s1523 = sshll.u32 [#allocation8], 4
      %s1524 = int_to_ptr.vmem [resolvable:$true] %s1523
      %1526 = dma.vmem_to_hbm [thread:$0]  %s1524, 32, %s10, [#allocation4]
    $region57: #{tpu_custom_call.1} parent=1 // pred_fallthru
      _
    // Predicated region
    $region58: #{tpu_custom_call.1} parent=1 // pred_check
      _
    $region59: #{tpu_custom_call.1} parent=1 // pred_check_branch
      %1528 = sbr.rel (0) target = $region61
    $region60: #{tpu_custom_call.1} parent=1 // pred_region
      %1529 = dma.done [#allocation4], 32
    $region61: #{tpu_custom_call.1} parent=1 // pred_fallthru
      _
    %1530 = vsyncpa [#allocation3], 1
    %1531 = vsyncpa [#allocation6], 1
    %1532 = vsyncpa [#allocation4], 1

</llo_original>
